<compile_context>
chip_gen: v5e
topology: v5e:2x2
jax: 0.10.0
libtpu: 0.0.40
codegen_flags: <defaults>
</compile_context>

<pallas_src>
import functools

import jax
import jax.numpy as jnp
from jax.experimental import pallas as pl
from jax.experimental.pallas import tpu as pltpu


def _round_up(x, m):
    return (x + m - 1) // m * m


# --------------------------------------------------------------------------- #
# Kernel: two MXU matmuls per batch block, bias + ReLU fused in f32.           #
# --------------------------------------------------------------------------- #
def _representation_kernel(obs_ref, w1_ref, b1_ref, w2_ref, b2_ref, out_ref):
    # obs_ref : (BT, K1)   bf16  flattened (ci, d, h, w) observations, zero-padded lanes
    # w1_ref  : (K1, C1)   bf16  conv1 as a dense linear map (zero padding folded in)
    # b1_ref  : (1, C1)    f32
    # w2_ref  : (C1, 288)  bf16  conv2 as a dense linear map (zero padding folded in)
    # b2_ref  : (1, 288)   f32
    # out_ref : (BT, 288)  f32   rows = states, cols = (c_out, h, w)
    y1 = jnp.dot(obs_ref[...], w1_ref[...], preferred_element_type=jnp.float32)
    y1 = jnp.maximum(y1 + b1_ref[...], 0.0)                       # conv1 + bias + ReLU
    y2 = jnp.dot(y1.astype(jnp.bfloat16), w2_ref[...],
                 preferred_element_type=jnp.float32)
    out_ref[...] = y2 + b2_ref[...]                               # conv2 + bias


# --------------------------------------------------------------------------- #
# Parameters                                                                   #
# --------------------------------------------------------------------------- #
def init_params(key, num_observations):
    """Deterministic synthetic parameters in the torch Conv3d layout."""
    k1, k2, k3, k4 = jax.random.split(key, 4)
    return {
        "w1": 0.1 * jax.random.normal(k1, (32, num_observations, 2, 3, 3), jnp.float32),
        "b1": 0.1 * jax.random.normal(k2, (32,), jnp.float32),
        "w2": 0.05 * jax.random.normal(k3, (32, 32, 3, 3, 3), jnp.float32),
        "b2": 0.1 * jax.random.normal(k4, (32,), jnp.float32),
    }


def pack_params(params, lane=128):
    """One-time host-side repack: fold each conv (incl. its zero padding) into a
    dense (K, N) linear map, built exactly by probing the conv with basis vectors."""
    w1 = params["w1"].astype(jnp.float32)          # (32, c_in, 2, 3, 3)
    b1 = params["b1"].astype(jnp.float32)          # (32,)
    w2 = params["w2"].astype(jnp.float32)          # (32, 32, 3, 3, 3)
    b2 = params["b2"].astype(jnp.float32)          # (32,)
    c_in = w1.shape[1]
    k_raw = 18 * c_in
    dn = ("NCDHW", "OIDHW", "NCDHW")

    def f1(x_flat):                                 # (18*c_in,) -> (864,)  order (co, d, h, w)
        x = x_flat.reshape(1, c_in, 2, 3, 3)
        y = jax.lax.conv_general_dilated(
            x, w1, (1, 1, 1), [(1, 1), (1, 1), (1, 1)], dimension_numbers=dn,
            precision=jax.lax.Precision.HIGHEST)
        return (y + b1.reshape(1, 32, 1, 1, 1)).reshape(-1)

    def f2(y_flat):                                 # (864,) -> (288,)  order (co, h, w)
        y = y_flat.reshape(1, 32, 3, 3, 3)
        z = jax.lax.conv_general_dilated(
            y, w2, (1, 1, 1), [(0, 0), (1, 1), (1, 1)], dimension_numbers=dn,
            precision=jax.lax.Precision.HIGHEST)
        return (z + b2.reshape(1, 32, 1, 1, 1)).reshape(-1)

    b1_big = f1(jnp.zeros((k_raw,), jnp.float32))                        # (864,)
    w1_big = jax.vmap(f1)(jnp.eye(k_raw, dtype=jnp.float32)) - b1_big    # (18*c_in, 864)
    b2_big = f2(jnp.zeros((864,), jnp.float32))                          # (288,)
    w2_big = jax.vmap(f2)(jnp.eye(864, dtype=jnp.float32)) - b2_big      # (864, 288)

    k1p = _round_up(k_raw, lane)          # e.g. 128 for c_in = 4
    c1p = _round_up(864, lane)            # 896
    w1_pad = jnp.zeros((k1p, c1p), jnp.float32).at[:k_raw, :864].set(w1_big)
    b1_pad = jnp.zeros((1, c1p), jnp.float32).at[0, :864].set(b1_big)
    w2_pad = jnp.zeros((c1p, 288), jnp.float32).at[:864, :].set(w2_big)
    return {
        "w1": w1_pad.astype(jnp.bfloat16),
        "b1": b1_pad,
        "w2": w2_pad.astype(jnp.bfloat16),
        "b2": b2_big.reshape(1, 288),
    }


# --------------------------------------------------------------------------- #
# Forward wrappers                                                             #
# --------------------------------------------------------------------------- #
@functools.partial(jax.jit, static_argnames=("block_b",))
def representation_batched(obs, packed, *, block_b=256):
    """obs: (B, C_in, 2, 3, 3) float32 (torch layout) -> (B, 32, 3, 3)."""
    B, c_in = obs.shape[0], obs.shape[1]
    k_raw = 18 * c_in
    K1, C1 = packed["w1"].shape

    x = obs.reshape(B, k_raw).astype(jnp.bfloat16)       # flatten (ci, d, h, w)
    x = jnp.pad(x, ((0, 0), (0, K1 - k_raw)))            # lane-align K to 128
    bt = min(block_b, _round_up(B, 8))                   # states per grid step
    bp = _round_up(B, bt)
    if bp != B:
        x = jnp.pad(x, ((0, bp - B), (0, 0)))            # pad batch to a whole block

    out = pl.pallas_call(
        _representation_kernel,
        out_shape=jax.ShapeDtypeStruct((bp, 288), jnp.float32),
        grid_spec=pltpu.PrefetchScalarGridSpec(
            num_scalar_prefetch=0,
            grid=(bp // bt,),
            in_specs=[
                pl.BlockSpec((bt, K1), lambda i: (i, 0)),
                # constant index_maps: weights/biases stay VMEM-resident across steps
                pl.BlockSpec((K1, C1), lambda i: (0, 0)),
                pl.BlockSpec((1, C1), lambda i: (0, 0)),
                pl.BlockSpec((C1, 288), lambda i: (0, 0)),
                pl.BlockSpec((1, 288), lambda i: (0, 0)),
            ],
            out_specs=pl.BlockSpec((bt, 288), lambda i: (i, 0)),
        ),
        compiler_params=pltpu.CompilerParams(
            dimension_semantics=("parallel",)),
    )(x, packed["w1"], packed["b1"], packed["w2"], packed["b2"])
    # (Bp, 288) -> drop batch padding -> (B, 32, 3, 3)  (cols already (c, h, w))
    return out[:B].reshape(B, 32, 3, 3)


def representation_forward(observations, packed, num_observations):
    """Module-equivalent single-state forward: observations (L, 2, 3, 3) -> (32, 3, 3)."""
    obs = jnp.asarray(observations, dtype=jnp.float32)            # (L, 2, 3, 3)
    if obs.shape[0] < num_observations:                           # repeat last frame
        rep = jnp.repeat(obs[-1:], num_observations - obs.shape[0], axis=0)
        obs = jnp.concatenate([obs, rep], axis=0)
    return representation_batched(obs[None], packed)[0]           # (32, 3, 3)


def reference_forward(observations, params, num_observations):
    """Pure-JAX reference (matches torch.nn.functional semantics, f32 HIGHEST)."""
    obs = jnp.asarray(observations, dtype=jnp.float32)
    if obs.shape[0] < num_observations:
        rep = jnp.repeat(obs[-1:], num_observations - obs.shape[0], axis=0)
        obs = jnp.concatenate([obs, rep], axis=0)
    x = obs[None]                                                 # (1, C_in, 2, 3, 3)
    dn = ("NCDHW", "OIDHW", "NCDHW")
    y = jax.lax.conv_general_dilated(
        x, params["w1"], (1, 1, 1), [(1, 1), (1, 1), (1, 1)],
        dimension_numbers=dn, precision=jax.lax.Precision.HIGHEST)
    y = jax.nn.relu(y + params["b1"].reshape(1, 32, 1, 1, 1))
    z = jax.lax.conv_general_dilated(
        y, params["w2"], (1, 1, 1), [(0, 0), (1, 1), (1, 1)],
        dimension_numbers=dn, precision=jax.lax.Precision.HIGHEST)
    z = z + params["b2"].reshape(1, 32, 1, 1, 1)
    return z[0, :, 0]                                             # (32, 3, 3)


if __name__ == "__main__":
    NUM_OBSERVATIONS = 4
    BATCH = 4
    TOL = 2e-2   # accommodates bf16 matmul operands vs f32-HIGHEST reference

    key = jax.random.PRNGKey(0)
    pkey, okey = jax.random.split(key)
    params = init_params(pkey, NUM_OBSERVATIONS)
    packed = pack_params(params)

    # --- module-equivalent single-state forward -----------------------------
    observations = jax.random.normal(okey, (NUM_OBSERVATIONS, 2, 3, 3), jnp.float32)
    state = jax.block_until_ready(
        representation_forward(observations, packed, NUM_OBSERVATIONS))
    ref = reference_forward(observations, params, NUM_OBSERVATIONS)
    assert state.shape == (32, 3, 3), state.shape
    assert jnp.allclose(state, ref, atol=TOL, rtol=TOL), float(
        jnp.max(jnp.abs(state - ref)))

    # --- short history (frame-repeat padding path, like the torch module) ---
    short = observations[:2]
    state_s = jax.block_until_ready(
        representation_forward(short, packed, NUM_OBSERVATIONS))
    ref_s = reference_forward(short, params, NUM_OBSERVATIONS)
    assert jnp.allclose(state_s, ref_s, atol=TOL, rtol=TOL)

    # --- batched path (single grid step, batch padded to a multiple of 8) ---
    obs_batch = jax.random.normal(
        jax.random.PRNGKey(1), (BATCH, NUM_OBSERVATIONS, 2, 3, 3), jnp.float32)
    states = jax.block_until_ready(representation_batched(obs_batch, packed))
    assert states.shape == (BATCH, 32, 3, 3), states.shape
    for i in range(BATCH):
        ref_i = reference_forward(obs_batch[i], params, NUM_OBSERVATIONS)
        assert jnp.allclose(states[i], ref_i, atol=TOL, rtol=TOL), i

    # --- multi-grid-step path (batch padding + several "parallel" steps) ----
    B2 = 40
    obs_b2 = jax.random.normal(
        jax.random.PRNGKey(2), (B2, NUM_OBSERVATIONS, 2, 3, 3), jnp.float32)
    states2 = jax.block_until_ready(
        representation_batched(obs_b2, packed, block_b=16))       # grid = 3 steps
    assert states2.shape == (B2, 32, 3, 3), states2.shape
    for i in list(range(0, B2, 7)) + [B2 - 1]:
        ref_i = reference_forward(obs_b2[i], params, NUM_OBSERVATIONS)
        assert jnp.allclose(states2[i], ref_i, atol=TOL, rtol=TOL), i

    print("KERNEL_OK")
</pallas_src>

<mosaic_0001>
module attributes {stable_mosaic.version = 11 : i64} {
  func.func @_representation_kernel(%arg0: i32, %arg1: memref<8x128xbf16, #tpu.memory_space<vmem>>, %arg2: memref<128x896xbf16, #tpu.memory_space<vmem>>, %arg3: memref<1x896xf32, #tpu.memory_space<vmem>>, %arg4: memref<896x288xbf16, #tpu.memory_space<vmem>>, %arg5: memref<1x288xf32, #tpu.memory_space<vmem>>, %arg6: memref<8x288xf32, #tpu.memory_space<vmem>>) attributes {dimension_semantics = [#tpu.dimension_semantics<parallel>], iteration_bounds = array<i64: 1>, scalar_prefetch = 0 : i64, scratch_operands = 0 : i64, tpu.core_type = #tpu.core_type<tc>, window_params = [{transform_indices = @transform_0, window_bounds = array<i64: 8, 128>}, {pipeline_mode = #tpu.pipeline_mode<synchronous>, transform_indices = @transform_1, window_bounds = array<i64: 128, 896>}, {pipeline_mode = #tpu.pipeline_mode<synchronous>, transform_indices = @transform_2, window_bounds = array<i64: 1, 896>}, {pipeline_mode = #tpu.pipeline_mode<synchronous>, transform_indices = @transform_3, window_bounds = array<i64: 896, 288>}, {pipeline_mode = #tpu.pipeline_mode<synchronous>, transform_indices = @transform_4, window_bounds = array<i64: 1, 288>}, {transform_indices = @transform_5, window_bounds = array<i64: 8, 288>}]} {
    %c0 = arith.constant 0 : index
    %c0_0 = arith.constant 0 : index
    %0 = vector.load %arg1[%c0, %c0_0] : memref<8x128xbf16, #tpu.memory_space<vmem>>, vector<8x128xbf16>
    %c0_1 = arith.constant 0 : index
    %c0_2 = arith.constant 0 : index
    %1 = vector.load %arg2[%c0_1, %c0_2] : memref<128x896xbf16, #tpu.memory_space<vmem>>, vector<128x896xbf16>
    %cst = arith.constant dense<0.000000e+00> : vector<8x896xf32>
    %2 = tpu.matmul %0, %1, %cst {dimension_numbers = #tpu.dot_dimension_numbers<[1], [0], [0], [1], [0, 0, 1, 1], [], []>} : vector<8x128xbf16>, vector<128x896xbf16>, vector<8x896xf32> -> vector<8x896xf32>
    %c0_3 = arith.constant 0 : index
    %c0_4 = arith.constant 0 : index
    %3 = vector.load %arg3[%c0_3, %c0_4] : memref<1x896xf32, #tpu.memory_space<vmem>>, vector<1x896xf32>
    %4 = vector.broadcast %3 : vector<1x896xf32> to vector<8x896xf32>
    %5 = arith.addf %2, %4 : vector<8x896xf32>
    %cst_5 = arith.constant 0.000000e+00 : f32
    %6 = vector.broadcast %cst_5 : f32 to vector<8x896xf32>
    %7 = arith.maximumf %5, %6 : vector<8x896xf32>
    %8 = arith.truncf %7 : vector<8x896xf32> to vector<8x896xbf16>
    %c0_6 = arith.constant 0 : index
    %c0_7 = arith.constant 0 : index
    %9 = vector.load %arg4[%c0_6, %c0_7] : memref<896x288xbf16, #tpu.memory_space<vmem>>, vector<896x288xbf16>
    %cst_8 = arith.constant dense<0.000000e+00> : vector<8x288xf32>
    %10 = tpu.matmul %8, %9, %cst_8 {dimension_numbers = #tpu.dot_dimension_numbers<[1], [0], [0], [1], [0, 0, 1, 1], [], []>} : vector<8x896xbf16>, vector<896x288xbf16>, vector<8x288xf32> -> vector<8x288xf32>
    %c0_9 = arith.constant 0 : index
    %c0_10 = arith.constant 0 : index
    %11 = vector.load %arg5[%c0_9, %c0_10] : memref<1x288xf32, #tpu.memory_space<vmem>>, vector<1x288xf32>
    %12 = vector.broadcast %11 : vector<1x288xf32> to vector<8x288xf32>
    %13 = arith.addf %10, %12 : vector<8x288xf32>
    %c0_11 = arith.constant 0 : index
    %c0_12 = arith.constant 0 : index
    %14 = vector.load %arg6[%c0_11, %c0_12] : memref<8x288xf32, #tpu.memory_space<vmem>>, vector<8x288xf32>
    tpu.vector_store %arg6[%c0_11, %c0_12], %13 {strides = array<i32>} : memref<8x288xf32, #tpu.memory_space<vmem>>, vector<8x288xf32>,
    return
  }
  func.func @transform_0(%arg0: i32) -> (i32, i32) {
    %c0_i32 = arith.constant 0 : i32
    %c0_i32_0 = arith.constant 0 : i32
    return %arg0, %c0_i32 : i32, i32
  }
  func.func @transform_1(%arg0: i32) -> (i32, i32) {
    %c0_i32 = arith.constant 0 : i32
    %c0_i32_0 = arith.constant 0 : i32
    %c0_i32_1 = arith.constant 0 : i32
    return %c0_i32, %c0_i32_0 : i32, i32
  }
  func.func @transform_2(%arg0: i32) -> (i32, i32) {
    %c0_i32 = arith.constant 0 : i32
    %c0_i32_0 = arith.constant 0 : i32
    %c0_i32_1 = arith.constant 0 : i32
    return %c0_i32, %c0_i32_0 : i32, i32
  }
  func.func @transform_3(%arg0: i32) -> (i32, i32) {
    %c0_i32 = arith.constant 0 : i32
    %c0_i32_0 = arith.constant 0 : i32
    %c0_i32_1 = arith.constant 0 : i32
    return %c0_i32, %c0_i32_0 : i32, i32
  }
  func.func @transform_4(%arg0: i32) -> (i32, i32) {
    %c0_i32 = arith.constant 0 : i32
    %c0_i32_0 = arith.constant 0 : i32
    %c0_i32_1 = arith.constant 0 : i32
    return %c0_i32, %c0_i32_0 : i32, i32
  }
  func.func @transform_5(%arg0: i32) -> (i32, i32) {
    %c0_i32 = arith.constant 0 : i32
    %c0_i32_0 = arith.constant 0 : i32
    return %arg0, %c0_i32 : i32, i32
  }
}

</mosaic_0001>

<llo_original>
// kernel: representation_batched.1
$region0: #{representation_batched.1}
  #allocation0 [shape = 'u32[]', space=smem, size = 0x4, offset = 0x4, fixed_abs, tag = 'smem constant byte address 0x4 - core index']
  #allocation1 [shape = 'u32[72,128]{1,0:T(1,128)}', space=vmem, size = 0x9000, scoped, tag = 'internal scratch']
  %s0 = inlined_call_operand.vmem [shape: bf16[8,128], index: 0, kind: input, shape index: {}]
  %s1 = inlined_call_operand.vmem [shape: bf16[128,896], index: 1, kind: input, shape index: {}]
  %s2 = inlined_call_operand.vmem [shape: f32[1,896], index: 2, kind: input, shape index: {}]
  %s3 = inlined_call_operand.vmem [shape: bf16[896,288], index: 3, kind: input, shape index: {}]
  %s4 = inlined_call_operand.vmem [shape: f32[1,288], index: 4, kind: input, shape index: {}]
  %s5 = inlined_call_operand.vmem [shape: f32[8,288], index: 5, kind: output, shape index: {}]
  %s6 = sld [smem:[#allocation0]]
  $region30: #{representation_batched.1} parent=0
    _
  %s8 = ssub.s32 1, %s6
  %s9 = scalar_select 0, %s8, %s6
  // Predicated region
  $region2: #{representation_batched.1} parent=0 // pred_check
    _
  $region3: #{representation_batched.1} parent=0 // pred_check_branch
    %11 = sbr.rel (0) target = $region5
  $region4: #{representation_batched.1} parent=0 // pred_region
    _
  $region5: #{representation_batched.1} parent=0 // pred_fallthru
    _
  // Predicated region
  $region6: #{representation_batched.1} parent=0 // pred_check
    _
  $region7: #{representation_batched.1} parent=0 // pred_check_branch
    %13 = sbr.rel (0) target = $region9
  $region8: #{representation_batched.1} parent=0 // pred_region
    _
  $region9: #{representation_batched.1} parent=0 // pred_fallthru
    _
  // Predicated region
  $region10: #{representation_batched.1} parent=0 // pred_check
    _
  $region11: #{representation_batched.1} parent=0 // pred_check_branch
    %15 = sbr.rel (0) target = $region13
  $region12: #{representation_batched.1} parent=0 // pred_region
    _
  $region13: #{representation_batched.1} parent=0 // pred_fallthru
    _
  // Predicated region
  $region14: #{representation_batched.1} parent=0 // pred_check
    _
  $region15: #{representation_batched.1} parent=0 // pred_check_branch
    %17 = sbr.rel (0) target = $region17
  $region16: #{representation_batched.1} parent=0 // pred_region
    _
  $region17: #{representation_batched.1} parent=0 // pred_fallthru
    _
  // Predicated region
  $region18: #{representation_batched.1} parent=0 // pred_check
    _
  $region19: #{representation_batched.1} parent=0 // pred_check_branch
    %19 = sbr.rel (0) target = $region21
  $region20: #{representation_batched.1} parent=0 // pred_region
    _
  $region21: #{representation_batched.1} parent=0 // pred_fallthru
    _
  %v20 = vld [vmem:[%s0] sm:$0xf]
  %v21 = vld [vmem:[%s1] sm:$0xff]
  %v22 = vld [vmem:[%s1 + $0x8] sm:$0xff]
  %v23 = vld [vmem:[%s1 + $0x10] sm:$0xff]
  %v24 = vld [vmem:[%s1 + $0x18] sm:$0xf]
  %v25 = vld [vmem:[%s1 + $0x1c] sm:$0xff]
  %v26 = vld [vmem:[%s1 + $0x24] sm:$0xff]
  %v27 = vld [vmem:[%s1 + $0x2c] sm:$0xff]
  %v28 = vld [vmem:[%s1 + $0x34] sm:$0xf]
  %v29 = vld [vmem:[%s1 + $0x38] sm:$0xff]
  %v30 = vld [vmem:[%s1 + $0x40] sm:$0xff]
  %v31 = vld [vmem:[%s1 + $0x48] sm:$0xff]
  %v32 = vld [vmem:[%s1 + $0x50] sm:$0xf]
  %v33 = vld [vmem:[%s1 + $0x54] sm:$0xff]
  %v34 = vld [vmem:[%s1 + $0x5c] sm:$0xff]
  %v35 = vld [vmem:[%s1 + $0x64] sm:$0xff]
  %v36 = vld [vmem:[%s1 + $0x6c] sm:$0xf]
  %v37 = vld [vmem:[%s1 + $0x70] sm:$0xff]
  %v38 = vld [vmem:[%s1 + $0x78] sm:$0xff]
  %v39 = vld [vmem:[%s1 + $0x80] sm:$0xff]
  %v40 = vld [vmem:[%s1 + $0x88] sm:$0xf]
  %v41 = vld [vmem:[%s1 + $0x8c] sm:$0xff]
  %v42 = vld [vmem:[%s1 + $0x94] sm:$0xff]
  %v43 = vld [vmem:[%s1 + $0x9c] sm:$0xff]
  %v44 = vld [vmem:[%s1 + $0xa4] sm:$0xf]
  %v45 = vld [vmem:[%s1 + $0xa8] sm:$0xff]
  %v46 = vld [vmem:[%s1 + $0xb0] sm:$0xff]
  %v47 = vld [vmem:[%s1 + $0xb8] sm:$0xff]
  %v48 = vld [vmem:[%s1 + $0xc0] sm:$0xf]
  %v49 = vld [vmem:[%s1 + $0xc4] sm:$0xff]
  %v50 = vld [vmem:[%s1 + $0xcc] sm:$0xff]
  %v51 = vld [vmem:[%s1 + $0xd4] sm:$0xff]
  %v52 = vld [vmem:[%s1 + $0xdc] sm:$0xf]
  %v53 = vld [vmem:[%s1 + $0xe0] sm:$0xff]
  %v54 = vld [vmem:[%s1 + $0xe8] sm:$0xff]
  %v55 = vld [vmem:[%s1 + $0xf0] sm:$0xff]
  %v56 = vld [vmem:[%s1 + $0xf8] sm:$0xf]
  %v57 = vld [vmem:[%s1 + $0xfc] sm:$0xff]
  %v58 = vld [vmem:[%s1 + $0x104] sm:$0xff]
  %v59 = vld [vmem:[%s1 + $0x10c] sm:$0xff]
  %v60 = vld [vmem:[%s1 + $0x114] sm:$0xf]
  %v61 = vld [vmem:[%s1 + $0x118] sm:$0xff]
  %v62 = vld [vmem:[%s1 + $0x120] sm:$0xff]
  %v63 = vld [vmem:[%s1 + $0x128] sm:$0xff]
  %v64 = vld [vmem:[%s1 + $0x130] sm:$0xf]
  %v65 = vld [vmem:[%s1 + $0x134] sm:$0xff]
  %v66 = vld [vmem:[%s1 + $0x13c] sm:$0xff]
  %v67 = vld [vmem:[%s1 + $0x144] sm:$0xff]
  %v68 = vld [vmem:[%s1 + $0x14c] sm:$0xf]
  %v69 = vld [vmem:[%s1 + $0x150] sm:$0xff]
  %v70 = vld [vmem:[%s1 + $0x158] sm:$0xff]
  %v71 = vld [vmem:[%s1 + $0x160] sm:$0xff]
  %v72 = vld [vmem:[%s1 + $0x168] sm:$0xf]
  %v73 = vld [vmem:[%s1 + $0x16c] sm:$0xff]
  %v74 = vld [vmem:[%s1 + $0x174] sm:$0xff]
  %v75 = vld [vmem:[%s1 + $0x17c] sm:$0xff]
  %v76 = vld [vmem:[%s1 + $0x184] sm:$0xf]
  %v77 = vld [vmem:[%s1 + $0x188] sm:$0xff]
  %v78 = vld [vmem:[%s1 + $0x190] sm:$0xff]
  %v79 = vld [vmem:[%s1 + $0x198] sm:$0xff]
  %v80 = vld [vmem:[%s1 + $0x1a0] sm:$0xf]
  %v81 = vld [vmem:[%s1 + $0x1a4] sm:$0xff]
  %v82 = vld [vmem:[%s1 + $0x1ac] sm:$0xff]
  %v83 = vld [vmem:[%s1 + $0x1b4] sm:$0xff]
  %v84 = vld [vmem:[%s1 + $0x1bc] sm:$0xf]
  %v85 = vld [vmem:[%s2] sm:$0xff]
  %v87 = vperm.slane %v85, 0
  %v88 = vperm.slane %v85, 1
  %v89 = vperm.slane %v85, 2
  %v90 = vperm.slane %v85, 3
  %v91 = vperm.slane %v85, 4
  %v92 = vperm.slane %v85, 5
  %v93 = vperm.slane %v85, 6
  %v165 = vunpack.c.l.b16 %v21
  %v166 = vunpack.c.h.b16 %v21
  %v167 = vunpack.c.l.b16 %v22
  %v168 = vunpack.c.h.b16 %v22
  %v169 = vunpack.c.l.b16 %v23
  %v170 = vunpack.c.h.b16 %v23
  %v171 = vunpack.c.l.b16 %v24
  %v172 = vunpack.c.l.b16 %v25
  %v173 = vunpack.c.h.b16 %v25
  %v174 = vunpack.c.l.b16 %v26
  %v175 = vunpack.c.h.b16 %v26
  %v176 = vunpack.c.l.b16 %v27
  %v177 = vunpack.c.h.b16 %v27
  %v178 = vunpack.c.l.b16 %v28
  %v179 = vunpack.c.l.b16 %v29
  %v180 = vunpack.c.h.b16 %v29
  %v181 = vunpack.c.l.b16 %v30
  %v182 = vunpack.c.h.b16 %v30
  %v183 = vunpack.c.l.b16 %v31
  %v184 = vunpack.c.h.b16 %v31
  %v185 = vunpack.c.l.b16 %v32
  %v186 = vunpack.c.l.b16 %v33
  %v187 = vunpack.c.h.b16 %v33
  %v188 = vunpack.c.l.b16 %v34
  %v189 = vunpack.c.h.b16 %v34
  %v190 = vunpack.c.l.b16 %v35
  %v191 = vunpack.c.h.b16 %v35
  %v192 = vunpack.c.l.b16 %v36
  %v193 = vunpack.c.l.b16 %v37
  %v194 = vunpack.c.h.b16 %v37
  %v195 = vunpack.c.l.b16 %v38
  %v196 = vunpack.c.h.b16 %v38
  %v197 = vunpack.c.l.b16 %v39
  %v198 = vunpack.c.h.b16 %v39
  %v199 = vunpack.c.l.b16 %v40
  %v200 = vunpack.c.l.b16 %v41
  %v201 = vunpack.c.h.b16 %v41
  %v202 = vunpack.c.l.b16 %v42
  %v203 = vunpack.c.h.b16 %v42
  %v204 = vunpack.c.l.b16 %v43
  %v205 = vunpack.c.h.b16 %v43
  %v206 = vunpack.c.l.b16 %v44
  %v207 = vunpack.c.l.b16 %v45
  %v208 = vunpack.c.h.b16 %v45
  %v209 = vunpack.c.l.b16 %v46
  %v210 = vunpack.c.h.b16 %v46
  %v211 = vunpack.c.l.b16 %v47
  %v212 = vunpack.c.h.b16 %v47
  %v213 = vunpack.c.l.b16 %v48
  %v214 = vunpack.c.l.b16 %v49
  %v215 = vunpack.c.h.b16 %v49
  %v216 = vunpack.c.l.b16 %v50
  %v217 = vunpack.c.h.b16 %v50
  %v218 = vunpack.c.l.b16 %v51
  %v219 = vunpack.c.h.b16 %v51
  %v220 = vunpack.c.l.b16 %v52
  %v221 = vunpack.c.l.b16 %v53
  %v222 = vunpack.c.h.b16 %v53
  %v223 = vunpack.c.l.b16 %v54
  %v224 = vunpack.c.h.b16 %v54
  %v225 = vunpack.c.l.b16 %v55
  %v226 = vunpack.c.h.b16 %v55
  %v227 = vunpack.c.l.b16 %v56
  %v228 = vunpack.c.l.b16 %v57
  %v229 = vunpack.c.h.b16 %v57
  %v230 = vunpack.c.l.b16 %v58
  %v231 = vunpack.c.h.b16 %v58
  %v232 = vunpack.c.l.b16 %v59
  %v233 = vunpack.c.h.b16 %v59
  %v234 = vunpack.c.l.b16 %v60
  %v235 = vunpack.c.l.b16 %v61
  %v236 = vunpack.c.h.b16 %v61
  %v237 = vunpack.c.l.b16 %v62
  %v238 = vunpack.c.h.b16 %v62
  %v239 = vunpack.c.l.b16 %v63
  %v240 = vunpack.c.h.b16 %v63
  %v241 = vunpack.c.l.b16 %v64
  %v242 = vunpack.c.l.b16 %v65
  %v243 = vunpack.c.h.b16 %v65
  %v244 = vunpack.c.l.b16 %v66
  %v245 = vunpack.c.h.b16 %v66
  %v246 = vunpack.c.l.b16 %v67
  %v247 = vunpack.c.h.b16 %v67
  %v248 = vunpack.c.l.b16 %v68
  %v249 = vunpack.c.l.b16 %v69
  %v250 = vunpack.c.h.b16 %v69
  %v251 = vunpack.c.l.b16 %v70
  %v252 = vunpack.c.h.b16 %v70
  %v253 = vunpack.c.l.b16 %v71
  %v254 = vunpack.c.h.b16 %v71
  %v255 = vunpack.c.l.b16 %v72
  %v256 = vunpack.c.l.b16 %v73
  %v257 = vunpack.c.h.b16 %v73
  %v258 = vunpack.c.l.b16 %v74
  %v259 = vunpack.c.h.b16 %v74
  %v260 = vunpack.c.l.b16 %v75
  %v261 = vunpack.c.h.b16 %v75
  %v262 = vunpack.c.l.b16 %v76
  %v263 = vunpack.c.l.b16 %v77
  %v264 = vunpack.c.h.b16 %v77
  %v265 = vunpack.c.l.b16 %v78
  %v266 = vunpack.c.h.b16 %v78
  %v267 = vunpack.c.l.b16 %v79
  %v268 = vunpack.c.h.b16 %v79
  %v269 = vunpack.c.l.b16 %v80
  %v270 = vunpack.c.l.b16 %v81
  %v271 = vunpack.c.h.b16 %v81
  %v272 = vunpack.c.l.b16 %v82
  %v273 = vunpack.c.h.b16 %v82
  %v274 = vunpack.c.l.b16 %v83
  %v275 = vunpack.c.h.b16 %v83
  %v276 = vunpack.c.l.b16 %v84
  %v277 = vpack.c.b16 %v172, %v165
  %v278 = vpack.c.b16 %v173, %v166
  %v279 = vpack.c.b16 %v174, %v167
  %v280 = vpack.c.b16 %v175, %v168
  %v281 = vpack.c.b16 %v176, %v169
  %v282 = vpack.c.b16 %v177, %v170
  %v283 = vpack.c.b16 %v178, %v171
  %v284 = vpack.c.b16 %v186, %v179
  %v285 = vpack.c.b16 %v187, %v180
  %v286 = vpack.c.b16 %v188, %v181
  %v287 = vpack.c.b16 %v189, %v182
  %v288 = vpack.c.b16 %v190, %v183
  %v289 = vpack.c.b16 %v191, %v184
  %v290 = vpack.c.b16 %v192, %v185
  %v291 = vpack.c.b16 %v200, %v193
  %v292 = vpack.c.b16 %v201, %v194
  %v293 = vpack.c.b16 %v202, %v195
  %v294 = vpack.c.b16 %v203, %v196
  %v295 = vpack.c.b16 %v204, %v197
  %v296 = vpack.c.b16 %v205, %v198
  %v297 = vpack.c.b16 %v206, %v199
  %v298 = vpack.c.b16 %v214, %v207
  %v299 = vpack.c.b16 %v215, %v208
  %v300 = vpack.c.b16 %v216, %v209
  %v301 = vpack.c.b16 %v217, %v210
  %v302 = vpack.c.b16 %v218, %v211
  %v303 = vpack.c.b16 %v219, %v212
  %v304 = vpack.c.b16 %v220, %v213
  %v305 = vpack.c.b16 %v228, %v221
  %v306 = vpack.c.b16 %v229, %v222
  %v307 = vpack.c.b16 %v230, %v223
  %v308 = vpack.c.b16 %v231, %v224
  %v309 = vpack.c.b16 %v232, %v225
  %v310 = vpack.c.b16 %v233, %v226
  %v311 = vpack.c.b16 %v234, %v227
  %v312 = vpack.c.b16 %v242, %v235
  %v313 = vpack.c.b16 %v243, %v236
  %v314 = vpack.c.b16 %v244, %v237
  %v315 = vpack.c.b16 %v245, %v238
  %v316 = vpack.c.b16 %v246, %v239
  %v317 = vpack.c.b16 %v247, %v240
  %v318 = vpack.c.b16 %v248, %v241
  %v319 = vpack.c.b16 %v256, %v249
  %v320 = vpack.c.b16 %v257, %v250
  %v321 = vpack.c.b16 %v258, %v251
  %v322 = vpack.c.b16 %v259, %v252
  %v323 = vpack.c.b16 %v260, %v253
  %v324 = vpack.c.b16 %v261, %v254
  %v325 = vpack.c.b16 %v262, %v255
  %v326 = vpack.c.b16 %v270, %v263
  %v327 = vpack.c.b16 %v271, %v264
  %v328 = vpack.c.b16 %v272, %v265
  %v329 = vpack.c.b16 %v273, %v266
  %v330 = vpack.c.b16 %v274, %v267
  %v331 = vpack.c.b16 %v275, %v268
  %v332 = vpack.c.b16 %v276, %v269
  %389 = vmatpush.bf16.msra.mxu0 %v326
  %390 = vmatpush.bf16.msra.mxu0 %v319
  %391 = vmatpush.bf16.msra.mxu0 %v312
  %392 = vmatpush.bf16.msra.mxu0 %v305
  %393 = vmatpush.bf16.msra.mxu0 %v298
  %394 = vmatpush.bf16.msra.mxu0 %v291
  %395 = vmatpush.bf16.msra.mxu0 %v284
  %396 = vmatpush.bf16.msra.mxu0 %v277
  %397 = vmatmul.bf16.gmra.mxu0 %v20
  %v398 = vpop.f32.mrf.mxu0
  %v399 = vadd.f32 %v87, %v398
  %v400 = vpop.f32.mrf.mxu0
  %401 = vdwg.mxu0
  %402 = vmatpush.bf16.msra.mxu0 %v327
  %403 = vmatpush.bf16.msra.mxu0 %v320
  %404 = vmatpush.bf16.msra.mxu0 %v313
  %405 = vmatpush.bf16.msra.mxu0 %v306
  %406 = vmatpush.bf16.msra.mxu0 %v299
  %407 = vmatpush.bf16.msra.mxu0 %v292
  %408 = vmatpush.bf16.msra.mxu0 %v285
  %409 = vmatpush.bf16.msra.mxu0 %v278
  %410 = vmatmul.bf16.gmra.mxu0 %v20
  %v411 = vpop.f32.mrf.mxu0
  %v412 = vadd.f32 %v88, %v411
  %v413 = vpop.f32.mrf.mxu0
  %414 = vdwg.mxu0
  %415 = vmatpush.bf16.msra.mxu0 %v328
  %416 = vmatpush.bf16.msra.mxu0 %v321
  %417 = vmatpush.bf16.msra.mxu0 %v314
  %418 = vmatpush.bf16.msra.mxu0 %v307
  %419 = vmatpush.bf16.msra.mxu0 %v300
  %420 = vmatpush.bf16.msra.mxu0 %v293
  %421 = vmatpush.bf16.msra.mxu0 %v286
  %422 = vmatpush.bf16.msra.mxu0 %v279
  %423 = vmatmul.bf16.gmra.mxu0 %v20
  %v424 = vpop.f32.mrf.mxu0
  %v425 = vadd.f32 %v89, %v424
  %v426 = vpop.f32.mrf.mxu0
  %427 = vdwg.mxu0
  %428 = vmatpush.bf16.msra.mxu0 %v329
  %429 = vmatpush.bf16.msra.mxu0 %v322
  %430 = vmatpush.bf16.msra.mxu0 %v315
  %431 = vmatpush.bf16.msra.mxu0 %v308
  %432 = vmatpush.bf16.msra.mxu0 %v301
  %433 = vmatpush.bf16.msra.mxu0 %v294
  %434 = vmatpush.bf16.msra.mxu0 %v287
  %435 = vmatpush.bf16.msra.mxu0 %v280
  %436 = vmatmul.bf16.gmra.mxu0 %v20
  %v437 = vpop.f32.mrf.mxu0
  %v438 = vadd.f32 %v90, %v437
  %v439 = vpop.f32.mrf.mxu0
  %440 = vdwg.mxu0
  %441 = vmatpush.bf16.msra.mxu0 %v330
  %442 = vmatpush.bf16.msra.mxu0 %v323
  %443 = vmatpush.bf16.msra.mxu0 %v316
  %444 = vmatpush.bf16.msra.mxu0 %v309
  %445 = vmatpush.bf16.msra.mxu0 %v302
  %446 = vmatpush.bf16.msra.mxu0 %v295
  %447 = vmatpush.bf16.msra.mxu0 %v288
  %448 = vmatpush.bf16.msra.mxu0 %v281
  %449 = vmatmul.bf16.gmra.mxu0 %v20
  %v450 = vpop.f32.mrf.mxu0
  %v451 = vadd.f32 %v91, %v450
  %v452 = vpop.f32.mrf.mxu0
  %453 = vdwg.mxu0
  %454 = vmatpush.bf16.msra.mxu0 %v331
  %455 = vmatpush.bf16.msra.mxu0 %v324
  %456 = vmatpush.bf16.msra.mxu0 %v317
  %457 = vmatpush.bf16.msra.mxu0 %v310
  %458 = vmatpush.bf16.msra.mxu0 %v303
  %459 = vmatpush.bf16.msra.mxu0 %v296
  %460 = vmatpush.bf16.msra.mxu0 %v289
  %461 = vmatpush.bf16.msra.mxu0 %v282
  %462 = vmatmul.bf16.gmra.mxu0 %v20
  %v463 = vpop.f32.mrf.mxu0
  %v464 = vadd.f32 %v92, %v463
  %v465 = vpop.f32.mrf.mxu0
  %466 = vdwg.mxu0
  %467 = vmatpush.bf16.msra.mxu0 %v332
  %468 = vmatpush.bf16.msra.mxu0 %v325
  %469 = vmatpush.bf16.msra.mxu0 %v318
  %470 = vmatpush.bf16.msra.mxu0 %v311
  %471 = vmatpush.bf16.msra.mxu0 %v304
  %472 = vmatpush.bf16.msra.mxu0 %v297
  %473 = vmatpush.bf16.msra.mxu0 %v290
  %474 = vmatpush.bf16.msra.mxu0 %v283
  %475 = vmatmul.bf16.gmra.mxu0 %v20
  %v476 = vpop.f32.mrf.mxu0
  %v477 = vadd.f32 %v93, %v476
  %v478 = vpop.f32.mrf.mxu0
  %479 = vdwg.mxu0
  %v480 = vmax.f32 %v399, 0.0
  %v481 = vmax.f32 %v412, 0.0
  %v482 = vmax.f32 %v425, 0.0
  %v483 = vmax.f32 %v438, 0.0
  %v484 = vmax.f32 %v451, 0.0
  %v485 = vmax.f32 %v464, 0.0
  %v486 = vmax.f32 %v477, 0.0
  %v487 = vpack.c.bf16 %v480, %v480
  %v488 = vpack.c.bf16 %v481, %v481
  %v489 = vpack.c.bf16 %v482, %v482
  %v490 = vpack.c.bf16 %v483, %v483
  %v491 = vpack.c.bf16 %v484, %v484
  %v492 = vpack.c.bf16 %v485, %v485
  %v493 = vpack.c.bf16 %v486, %v486
  %v494 = vld [vmem:[%s3] sm:$0xff]
  %v495 = vld [vmem:[%s3 + $0x8] sm:$0xf]
  %v496 = vld [vmem:[%s3 + $0xc] sm:$0xff]
  %v497 = vld [vmem:[%s3 + $0x14] sm:$0xf]
  %v498 = vld [vmem:[%s3 + $0x18] sm:$0xff]
  %v499 = vld [vmem:[%s3 + $0x20] sm:$0xf]
  %v500 = vld [vmem:[%s3 + $0x24] sm:$0xff]
  %v501 = vld [vmem:[%s3 + $0x2c] sm:$0xf]
  %v502 = vld [vmem:[%s3 + $0x30] sm:$0xff]
  %v503 = vld [vmem:[%s3 + $0x38] sm:$0xf]
  %v504 = vld [vmem:[%s3 + $0x3c] sm:$0xff]
  %v505 = vld [vmem:[%s3 + $0x44] sm:$0xf]
  %v506 = vld [vmem:[%s3 + $0x48] sm:$0xff]
  %v507 = vld [vmem:[%s3 + $0x50] sm:$0xf]
  %v508 = vld [vmem:[%s3 + $0x54] sm:$0xff]
  %v509 = vld [vmem:[%s3 + $0x5c] sm:$0xf]
  %v510 = vld [vmem:[%s3 + $0x60] sm:$0xff]
  %v511 = vld [vmem:[%s3 + $0x68] sm:$0xf]
  %v512 = vld [vmem:[%s3 + $0x6c] sm:$0xff]
  %v513 = vld [vmem:[%s3 + $0x74] sm:$0xf]
  %v514 = vld [vmem:[%s3 + $0x78] sm:$0xff]
  %v515 = vld [vmem:[%s3 + $0x80] sm:$0xf]
  %v516 = vld [vmem:[%s3 + $0x84] sm:$0xff]
  %v517 = vld [vmem:[%s3 + $0x8c] sm:$0xf]
  %v518 = vld [vmem:[%s3 + $0x90] sm:$0xff]
  %v519 = vld [vmem:[%s3 + $0x98] sm:$0xf]
  %v520 = vld [vmem:[%s3 + $0x9c] sm:$0xff]
  %v521 = vld [vmem:[%s3 + $0xa4] sm:$0xf]
  %v522 = vld [vmem:[%s3 + $0xa8] sm:$0xff]
  %v523 = vld [vmem:[%s3 + $0xb0] sm:$0xf]
  %v524 = vld [vmem:[%s3 + $0xb4] sm:$0xff]
  %v525 = vld [vmem:[%s3 + $0xbc] sm:$0xf]
  %v526 = vld [vmem:[%s3 + $0xc0] sm:$0xff]
  %v527 = vld [vmem:[%s3 + $0xc8] sm:$0xf]
  %v528 = vld [vmem:[%s3 + $0xcc] sm:$0xff]
  %v529 = vld [vmem:[%s3 + $0xd4] sm:$0xf]
  %v530 = vld [vmem:[%s3 + $0xd8] sm:$0xff]
  %v531 = vld [vmem:[%s3 + $0xe0] sm:$0xf]
  %v532 = vld [vmem:[%s3 + $0xe4] sm:$0xff]
  %v533 = vld [vmem:[%s3 + $0xec] sm:$0xf]
  %v534 = vld [vmem:[%s3 + $0xf0] sm:$0xff]
  %v535 = vld [vmem:[%s3 + $0xf8] sm:$0xf]
  %v536 = vld [vmem:[%s3 + $0xfc] sm:$0xff]
  %v537 = vld [vmem:[%s3 + $0x104] sm:$0xf]
  %v538 = vld [vmem:[%s3 + $0x108] sm:$0xff]
  %v539 = vld [vmem:[%s3 + $0x110] sm:$0xf]
  %v540 = vld [vmem:[%s3 + $0x114] sm:$0xff]
  %v541 = vld [vmem:[%s3 + $0x11c] sm:$0xf]
  %v542 = vld [vmem:[%s3 + $0x120] sm:$0xff]
  %v543 = vld [vmem:[%s3 + $0x128] sm:$0xf]
  %v544 = vld [vmem:[%s3 + $0x12c] sm:$0xff]
  %v545 = vld [vmem:[%s3 + $0x134] sm:$0xf]
  %v546 = vld [vmem:[%s3 + $0x138] sm:$0xff]
  %v547 = vld [vmem:[%s3 + $0x140] sm:$0xf]
  %v548 = vld [vmem:[%s3 + $0x144] sm:$0xff]
  %v549 = vld [vmem:[%s3 + $0x14c] sm:$0xf]
  %v550 = vld [vmem:[%s3 + $0x150] sm:$0xff]
  %v551 = vld [vmem:[%s3 + $0x158] sm:$0xf]
  %v552 = vld [vmem:[%s3 + $0x15c] sm:$0xff]
  %v553 = vld [vmem:[%s3 + $0x164] sm:$0xf]
  %v554 = vld [vmem:[%s3 + $0x168] sm:$0xff]
  %v555 = vld [vmem:[%s3 + $0x170] sm:$0xf]
  %v556 = vld [vmem:[%s3 + $0x174] sm:$0xff]
  %v557 = vld [vmem:[%s3 + $0x17c] sm:$0xf]
  %v558 = vld [vmem:[%s3 + $0x180] sm:$0xff]
  %v559 = vld [vmem:[%s3 + $0x188] sm:$0xf]
  %v560 = vld [vmem:[%s3 + $0x18c] sm:$0xff]
  %v561 = vld [vmem:[%s3 + $0x194] sm:$0xf]
  %v562 = vld [vmem:[%s3 + $0x198] sm:$0xff]
  %v563 = vld [vmem:[%s3 + $0x1a0] sm:$0xf]
  %v564 = vld [vmem:[%s3 + $0x1a4] sm:$0xff]
  %v565 = vld [vmem:[%s3 + $0x1ac] sm:$0xf]
  %v566 = vld [vmem:[%s3 + $0x1b0] sm:$0xff]
  %v567 = vld [vmem:[%s3 + $0x1b8] sm:$0xf]
  %v568 = vld [vmem:[%s3 + $0x1bc] sm:$0xff]
  %v569 = vld [vmem:[%s3 + $0x1c4] sm:$0xf]
  %v570 = vld [vmem:[%s3 + $0x1c8] sm:$0xff]
  %v571 = vld [vmem:[%s3 + $0x1d0] sm:$0xf]
  %v572 = vld [vmem:[%s3 + $0x1d4] sm:$0xff]
  %v573 = vld [vmem:[%s3 + $0x1dc] sm:$0xf]
  %v574 = vld [vmem:[%s3 + $0x1e0] sm:$0xff]
  %v575 = vld [vmem:[%s3 + $0x1e8] sm:$0xf]
  %v576 = vld [vmem:[%s3 + $0x1ec] sm:$0xff]
  %v577 = vld [vmem:[%s3 + $0x1f4] sm:$0xf]
  %v578 = vld [vmem:[%s3 + $0x1f8] sm:$0xff]
  %v579 = vld [vmem:[%s3 + $0x200] sm:$0xf]
  %v580 = vld [vmem:[%s3 + $0x204] sm:$0xff]
  %v581 = vld [vmem:[%s3 + $0x20c] sm:$0xf]
  %v582 = vld [vmem:[%s3 + $0x210] sm:$0xff]
  %v583 = vld [vmem:[%s3 + $0x218] sm:$0xf]
  %v584 = vld [vmem:[%s3 + $0x21c] sm:$0xff]
  %v585 = vld [vmem:[%s3 + $0x224] sm:$0xf]
  %v586 = vld [vmem:[%s3 + $0x228] sm:$0xff]
  %v587 = vld [vmem:[%s3 + $0x230] sm:$0xf]
  %v588 = vld [vmem:[%s3 + $0x234] sm:$0xff]
  %v589 = vld [vmem:[%s3 + $0x23c] sm:$0xf]
  %v590 = vld [vmem:[%s3 + $0x240] sm:$0xff]
  %v591 = vld [vmem:[%s3 + $0x248] sm:$0xf]
  %v592 = vld [vmem:[%s3 + $0x24c] sm:$0xff]
  %v593 = vld [vmem:[%s3 + $0x254] sm:$0xf]
  %v594 = vld [vmem:[%s3 + $0x258] sm:$0xff]
  %v595 = vld [vmem:[%s3 + $0x260] sm:$0xf]
  %v596 = vld [vmem:[%s3 + $0x264] sm:$0xff]
  %v597 = vld [vmem:[%s3 + $0x26c] sm:$0xf]
  %v598 = vld [vmem:[%s3 + $0x270] sm:$0xff]
  %v599 = vld [vmem:[%s3 + $0x278] sm:$0xf]
  %v600 = vld [vmem:[%s3 + $0x27c] sm:$0xff]
  %v601 = vld [vmem:[%s3 + $0x284] sm:$0xf]
  %v602 = vld [vmem:[%s3 + $0x288] sm:$0xff]
  %v603 = vld [vmem:[%s3 + $0x290] sm:$0xf]
  %v604 = vld [vmem:[%s3 + $0x294] sm:$0xff]
  %v605 = vld [vmem:[%s3 + $0x29c] sm:$0xf]
  %v606 = vld [vmem:[%s3 + $0x2a0] sm:$0xff]
  %v607 = vld [vmem:[%s3 + $0x2a8] sm:$0xf]
  %v608 = vld [vmem:[%s3 + $0x2ac] sm:$0xff]
  %v609 = vld [vmem:[%s3 + $0x2b4] sm:$0xf]
  %v610 = vld [vmem:[%s3 + $0x2b8] sm:$0xff]
  %v611 = vld [vmem:[%s3 + $0x2c0] sm:$0xf]
  %v612 = vld [vmem:[%s3 + $0x2c4] sm:$0xff]
  %v613 = vld [vmem:[%s3 + $0x2cc] sm:$0xf]
  %v614 = vld [vmem:[%s3 + $0x2d0] sm:$0xff]
  %v615 = vld [vmem:[%s3 + $0x2d8] sm:$0xf]
  %v616 = vld [vmem:[%s3 + $0x2dc] sm:$0xff]
  %v617 = vld [vmem:[%s3 + $0x2e4] sm:$0xf]
  %v618 = vld [vmem:[%s3 + $0x2e8] sm:$0xff]
  %v619 = vld [vmem:[%s3 + $0x2f0] sm:$0xf]
  %v620 = vld [vmem:[%s3 + $0x2f4] sm:$0xff]
  %v621 = vld [vmem:[%s3 + $0x2fc] sm:$0xf]
  %v622 = vld [vmem:[%s3 + $0x300] sm:$0xff]
  %v623 = vld [vmem:[%s3 + $0x308] sm:$0xf]
  %v624 = vld [vmem:[%s3 + $0x30c] sm:$0xff]
  %v625 = vld [vmem:[%s3 + $0x314] sm:$0xf]
  %v626 = vld [vmem:[%s3 + $0x318] sm:$0xff]
  %v627 = vld [vmem:[%s3 + $0x320] sm:$0xf]
  %v628 = vld [vmem:[%s3 + $0x324] sm:$0xff]
  %v629 = vld [vmem:[%s3 + $0x32c] sm:$0xf]
  %v630 = vld [vmem:[%s3 + $0x330] sm:$0xff]
  %v631 = vld [vmem:[%s3 + $0x338] sm:$0xf]
  %v632 = vld [vmem:[%s3 + $0x33c] sm:$0xff]
  %v633 = vld [vmem:[%s3 + $0x344] sm:$0xf]
  %v634 = vld [vmem:[%s3 + $0x348] sm:$0xff]
  %v635 = vld [vmem:[%s3 + $0x350] sm:$0xf]
  %v636 = vld [vmem:[%s3 + $0x354] sm:$0xff]
  %v637 = vld [vmem:[%s3 + $0x35c] sm:$0xf]
  %v638 = vld [vmem:[%s3 + $0x360] sm:$0xff]
  %v639 = vld [vmem:[%s3 + $0x368] sm:$0xf]
  %v640 = vld [vmem:[%s3 + $0x36c] sm:$0xff]
  %v641 = vld [vmem:[%s3 + $0x374] sm:$0xf]
  %v642 = vld [vmem:[%s3 + $0x378] sm:$0xff]
  %v643 = vld [vmem:[%s3 + $0x380] sm:$0xf]
  %v644 = vld [vmem:[%s3 + $0x384] sm:$0xff]
  %v645 = vld [vmem:[%s3 + $0x38c] sm:$0xf]
  %v646 = vld [vmem:[%s3 + $0x390] sm:$0xff]
  %v647 = vld [vmem:[%s3 + $0x398] sm:$0xf]
  %v648 = vld [vmem:[%s3 + $0x39c] sm:$0xff]
  %v649 = vld [vmem:[%s3 + $0x3a4] sm:$0xf]
  %v650 = vld [vmem:[%s3 + $0x3a8] sm:$0xff]
  %v651 = vld [vmem:[%s3 + $0x3b0] sm:$0xf]
  %v652 = vld [vmem:[%s3 + $0x3b4] sm:$0xff]
  %v653 = vld [vmem:[%s3 + $0x3bc] sm:$0xf]
  %v654 = vld [vmem:[%s3 + $0x3c0] sm:$0xff]
  %v655 = vld [vmem:[%s3 + $0x3c8] sm:$0xf]
  %v656 = vld [vmem:[%s3 + $0x3cc] sm:$0xff]
  %v657 = vld [vmem:[%s3 + $0x3d4] sm:$0xf]
  %v658 = vld [vmem:[%s3 + $0x3d8] sm:$0xff]
  %v659 = vld [vmem:[%s3 + $0x3e0] sm:$0xf]
  %v660 = vld [vmem:[%s3 + $0x3e4] sm:$0xff]
  %v661 = vld [vmem:[%s3 + $0x3ec] sm:$0xf]
  %v662 = vld [vmem:[%s3 + $0x3f0] sm:$0xff]
  %v663 = vld [vmem:[%s3 + $0x3f8] sm:$0xf]
  %v664 = vld [vmem:[%s3 + $0x3fc] sm:$0xff]
  %v665 = vld [vmem:[%s3 + $0x404] sm:$0xf]
  %v666 = vld [vmem:[%s3 + $0x408] sm:$0xff]
  %v667 = vld [vmem:[%s3 + $0x410] sm:$0xf]
  %v668 = vld [vmem:[%s3 + $0x414] sm:$0xff]
  %v669 = vld [vmem:[%s3 + $0x41c] sm:$0xf]
  %v670 = vld [vmem:[%s3 + $0x420] sm:$0xff]
  %v671 = vld [vmem:[%s3 + $0x428] sm:$0xf]
  %v672 = vld [vmem:[%s3 + $0x42c] sm:$0xff]
  %v673 = vld [vmem:[%s3 + $0x434] sm:$0xf]
  %v674 = vld [vmem:[%s3 + $0x438] sm:$0xff]
  %v675 = vld [vmem:[%s3 + $0x440] sm:$0xf]
  %v676 = vld [vmem:[%s3 + $0x444] sm:$0xff]
  %v677 = vld [vmem:[%s3 + $0x44c] sm:$0xf]
  %v678 = vld [vmem:[%s3 + $0x450] sm:$0xff]
  %v679 = vld [vmem:[%s3 + $0x458] sm:$0xf]
  %v680 = vld [vmem:[%s3 + $0x45c] sm:$0xff]
  %v681 = vld [vmem:[%s3 + $0x464] sm:$0xf]
  %v682 = vld [vmem:[%s3 + $0x468] sm:$0xff]
  %v683 = vld [vmem:[%s3 + $0x470] sm:$0xf]
  %v684 = vld [vmem:[%s3 + $0x474] sm:$0xff]
  %v685 = vld [vmem:[%s3 + $0x47c] sm:$0xf]
  %v686 = vld [vmem:[%s3 + $0x480] sm:$0xff]
  %v687 = vld [vmem:[%s3 + $0x488] sm:$0xf]
  %v688 = vld [vmem:[%s3 + $0x48c] sm:$0xff]
  %v689 = vld [vmem:[%s3 + $0x494] sm:$0xf]
  %v690 = vld [vmem:[%s3 + $0x498] sm:$0xff]
  %v691 = vld [vmem:[%s3 + $0x4a0] sm:$0xf]
  %v692 = vld [vmem:[%s3 + $0x4a4] sm:$0xff]
  %v693 = vld [vmem:[%s3 + $0x4ac] sm:$0xf]
  %v694 = vld [vmem:[%s3 + $0x4b0] sm:$0xff]
  %v695 = vld [vmem:[%s3 + $0x4b8] sm:$0xf]
  %v696 = vld [vmem:[%s3 + $0x4bc] sm:$0xff]
  %v697 = vld [vmem:[%s3 + $0x4c4] sm:$0xf]
  %v698 = vld [vmem:[%s3 + $0x4c8] sm:$0xff]
  %v699 = vld [vmem:[%s3 + $0x4d0] sm:$0xf]
  %v700 = vld [vmem:[%s3 + $0x4d4] sm:$0xff]
  %v701 = vld [vmem:[%s3 + $0x4dc] sm:$0xf]
  %v702 = vld [vmem:[%s3 + $0x4e0] sm:$0xff]
  %v703 = vld [vmem:[%s3 + $0x4e8] sm:$0xf]
  %v704 = vld [vmem:[%s3 + $0x4ec] sm:$0xff]
  %v705 = vld [vmem:[%s3 + $0x4f4] sm:$0xf]
  %v706 = vld [vmem:[%s3 + $0x4f8] sm:$0xff]
  %v707 = vld [vmem:[%s3 + $0x500] sm:$0xf]
  %v708 = vld [vmem:[%s3 + $0x504] sm:$0xff]
  %v709 = vld [vmem:[%s3 + $0x50c] sm:$0xf]
  %v710 = vld [vmem:[%s3 + $0x510] sm:$0xff]
  %v711 = vld [vmem:[%s3 + $0x518] sm:$0xf]
  %v712 = vld [vmem:[%s3 + $0x51c] sm:$0xff]
  %v713 = vld [vmem:[%s3 + $0x524] sm:$0xf]
  %v714 = vld [vmem:[%s3 + $0x528] sm:$0xff]
  %v715 = vld [vmem:[%s3 + $0x530] sm:$0xf]
  %v716 = vld [vmem:[%s3 + $0x534] sm:$0xff]
  %v717 = vld [vmem:[%s3 + $0x53c] sm:$0xf]
  %v718 = vld [vmem:[%s4] sm:$0x7]
  %v720 = vperm.slane %v718, 0
  %v721 = vperm.slane %v718, 1
  %v722 = vperm.slane %v718, 2
  %v950 = vunpack.c.l.b16 %v494
  %v951 = vunpack.c.h.b16 %v494
  %v952 = vunpack.c.l.b16 %v495
  %v953 = vunpack.c.l.b16 %v496
  %v954 = vunpack.c.h.b16 %v496
  %v955 = vunpack.c.l.b16 %v497
  %v956 = vunpack.c.l.b16 %v498
  %v957 = vunpack.c.h.b16 %v498
  %v958 = vunpack.c.l.b16 %v499
  %v959 = vunpack.c.l.b16 %v500
  %v960 = vunpack.c.h.b16 %v500
  %v961 = vunpack.c.l.b16 %v501
  %v962 = vunpack.c.l.b16 %v502
  %v963 = vunpack.c.h.b16 %v502
  %v964 = vunpack.c.l.b16 %v503
  %v965 = vunpack.c.l.b16 %v504
  %v966 = vunpack.c.h.b16 %v504
  %v967 = vunpack.c.l.b16 %v505
  %v968 = vunpack.c.l.b16 %v506
  %v969 = vunpack.c.h.b16 %v506
  %v970 = vunpack.c.l.b16 %v507
  %v971 = vunpack.c.l.b16 %v508
  %v972 = vunpack.c.h.b16 %v508
  %v973 = vunpack.c.l.b16 %v509
  %v974 = vunpack.c.l.b16 %v510
  %v975 = vunpack.c.h.b16 %v510
  %v976 = vunpack.c.l.b16 %v511
  %v977 = vunpack.c.l.b16 %v512
  %v978 = vunpack.c.h.b16 %v512
  %v979 = vunpack.c.l.b16 %v513
  %v980 = vunpack.c.l.b16 %v514
  %v981 = vunpack.c.h.b16 %v514
  %v982 = vunpack.c.l.b16 %v515
  %v983 = vunpack.c.l.b16 %v516
  %v984 = vunpack.c.h.b16 %v516
  %v985 = vunpack.c.l.b16 %v517
  %v986 = vunpack.c.l.b16 %v518
  %v987 = vunpack.c.h.b16 %v518
  %v988 = vunpack.c.l.b16 %v519
  %v989 = vunpack.c.l.b16 %v520
  %v990 = vunpack.c.h.b16 %v520
  %v991 = vunpack.c.l.b16 %v521
  %v992 = vunpack.c.l.b16 %v522
  %v993 = vunpack.c.h.b16 %v522
  %v994 = vunpack.c.l.b16 %v523
  %v995 = vunpack.c.l.b16 %v524
  %v996 = vunpack.c.h.b16 %v524
  %v997 = vunpack.c.l.b16 %v525
  %v998 = vunpack.c.l.b16 %v526
  %v999 = vunpack.c.h.b16 %v526
  %v1000 = vunpack.c.l.b16 %v527
  %v1001 = vunpack.c.l.b16 %v528
  %v1002 = vunpack.c.h.b16 %v528
  %v1003 = vunpack.c.l.b16 %v529
  %v1004 = vunpack.c.l.b16 %v530
  %v1005 = vunpack.c.h.b16 %v530
  %v1006 = vunpack.c.l.b16 %v531
  %v1007 = vunpack.c.l.b16 %v532
  %v1008 = vunpack.c.h.b16 %v532
  %v1009 = vunpack.c.l.b16 %v533
  %v1010 = vunpack.c.l.b16 %v534
  %v1011 = vunpack.c.h.b16 %v534
  %v1012 = vunpack.c.l.b16 %v535
  %v1013 = vunpack.c.l.b16 %v536
  %v1014 = vunpack.c.h.b16 %v536
  %v1015 = vunpack.c.l.b16 %v537
  %v1016 = vunpack.c.l.b16 %v538
  %v1017 = vunpack.c.h.b16 %v538
  %v1018 = vunpack.c.l.b16 %v539
  %v1019 = vunpack.c.l.b16 %v540
  %v1020 = vunpack.c.h.b16 %v540
  %v1021 = vunpack.c.l.b16 %v541
  %v1022 = vunpack.c.l.b16 %v542
  %v1023 = vunpack.c.h.b16 %v542
  %v1024 = vunpack.c.l.b16 %v543
  %v1025 = vunpack.c.l.b16 %v544
  %v1026 = vunpack.c.h.b16 %v544
  %v1027 = vunpack.c.l.b16 %v545
  %v1028 = vunpack.c.l.b16 %v546
  %v1029 = vunpack.c.h.b16 %v546
  %v1030 = vunpack.c.l.b16 %v547
  %v1031 = vunpack.c.l.b16 %v548
  %v1032 = vunpack.c.h.b16 %v548
  %v1033 = vunpack.c.l.b16 %v549
  %v1034 = vunpack.c.l.b16 %v550
  %v1035 = vunpack.c.h.b16 %v550
  %v1036 = vunpack.c.l.b16 %v551
  %v1037 = vunpack.c.l.b16 %v552
  %v1038 = vunpack.c.h.b16 %v552
  %v1039 = vunpack.c.l.b16 %v553
  %v1040 = vunpack.c.l.b16 %v554
  %v1041 = vunpack.c.h.b16 %v554
  %v1042 = vunpack.c.l.b16 %v555
  %v1043 = vunpack.c.l.b16 %v556
  %v1044 = vunpack.c.h.b16 %v556
  %v1045 = vunpack.c.l.b16 %v557
  %v1046 = vunpack.c.l.b16 %v558
  %v1047 = vunpack.c.h.b16 %v558
  %v1048 = vunpack.c.l.b16 %v559
  %v1049 = vunpack.c.l.b16 %v560
  %v1050 = vunpack.c.h.b16 %v560
  %v1051 = vunpack.c.l.b16 %v561
  %v1052 = vunpack.c.l.b16 %v562
  %v1053 = vunpack.c.h.b16 %v562
  %v1054 = vunpack.c.l.b16 %v563
  %v1055 = vunpack.c.l.b16 %v564
  %v1056 = vunpack.c.h.b16 %v564
  %v1057 = vunpack.c.l.b16 %v565
  %v1058 = vunpack.c.l.b16 %v566
  %v1059 = vunpack.c.h.b16 %v566
  %v1060 = vunpack.c.l.b16 %v567
  %v1061 = vunpack.c.l.b16 %v568
  %v1062 = vunpack.c.h.b16 %v568
  %v1063 = vunpack.c.l.b16 %v569
  %v1064 = vunpack.c.l.b16 %v570
  %v1065 = vunpack.c.h.b16 %v570
  %v1066 = vunpack.c.l.b16 %v571
  %v1067 = vunpack.c.l.b16 %v572
  %v1068 = vunpack.c.h.b16 %v572
  %v1069 = vunpack.c.l.b16 %v573
  %v1070 = vunpack.c.l.b16 %v574
  %v1071 = vunpack.c.h.b16 %v574
  %v1072 = vunpack.c.l.b16 %v575
  %v1073 = vunpack.c.l.b16 %v576
  %v1074 = vunpack.c.h.b16 %v576
  %v1075 = vunpack.c.l.b16 %v577
  %v1076 = vunpack.c.l.b16 %v578
  %v1077 = vunpack.c.h.b16 %v578
  %v1078 = vunpack.c.l.b16 %v579
  %v1079 = vunpack.c.l.b16 %v580
  %v1080 = vunpack.c.h.b16 %v580
  %v1081 = vunpack.c.l.b16 %v581
  %v1082 = vunpack.c.l.b16 %v582
  %v1083 = vunpack.c.h.b16 %v582
  %v1084 = vunpack.c.l.b16 %v583
  %v1085 = vunpack.c.l.b16 %v584
  %v1086 = vunpack.c.h.b16 %v584
  %v1087 = vunpack.c.l.b16 %v585
  %v1088 = vunpack.c.l.b16 %v586
  %v1089 = vunpack.c.h.b16 %v586
  %v1090 = vunpack.c.l.b16 %v587
  %v1091 = vunpack.c.l.b16 %v588
  %v1092 = vunpack.c.h.b16 %v588
  %v1093 = vunpack.c.l.b16 %v589
  %v1094 = vunpack.c.l.b16 %v590
  %v1095 = vunpack.c.h.b16 %v590
  %v1096 = vunpack.c.l.b16 %v591
  %v1097 = vunpack.c.l.b16 %v592
  %v1098 = vunpack.c.h.b16 %v592
  %v1099 = vunpack.c.l.b16 %v593
  %v1100 = vunpack.c.l.b16 %v594
  %v1101 = vunpack.c.h.b16 %v594
  %v1102 = vunpack.c.l.b16 %v595
  %v1103 = vunpack.c.l.b16 %v596
  %v1104 = vunpack.c.h.b16 %v596
  %v1105 = vunpack.c.l.b16 %v597
  %v1106 = vunpack.c.l.b16 %v598
  %v1107 = vunpack.c.h.b16 %v598
  %v1108 = vunpack.c.l.b16 %v599
  %v1109 = vunpack.c.l.b16 %v600
  %v1110 = vunpack.c.h.b16 %v600
  %v1111 = vunpack.c.l.b16 %v601
  %v1112 = vunpack.c.l.b16 %v602
  %v1113 = vunpack.c.h.b16 %v602
  %v1114 = vunpack.c.l.b16 %v603
  %v1115 = vunpack.c.l.b16 %v604
  %v1116 = vunpack.c.h.b16 %v604
  %v1117 = vunpack.c.l.b16 %v605
  %v1118 = vunpack.c.l.b16 %v606
  %v1119 = vunpack.c.h.b16 %v606
  %v1120 = vunpack.c.l.b16 %v607
  %v1121 = vunpack.c.l.b16 %v608
  %v1122 = vunpack.c.h.b16 %v608
  %v1123 = vunpack.c.l.b16 %v609
  %v1124 = vunpack.c.l.b16 %v610
  %v1125 = vunpack.c.h.b16 %v610
  %v1126 = vunpack.c.l.b16 %v611
  %v1127 = vunpack.c.l.b16 %v612
  %v1128 = vunpack.c.h.b16 %v612
  %v1129 = vunpack.c.l.b16 %v613
  %v1130 = vunpack.c.l.b16 %v614
  %v1131 = vunpack.c.h.b16 %v614
  %v1132 = vunpack.c.l.b16 %v615
  %v1133 = vunpack.c.l.b16 %v616
  %v1134 = vunpack.c.h.b16 %v616
  %v1135 = vunpack.c.l.b16 %v617
  %v1136 = vunpack.c.l.b16 %v618
  %v1137 = vunpack.c.h.b16 %v618
  %v1138 = vunpack.c.l.b16 %v619
  %v1139 = vunpack.c.l.b16 %v620
  %v1140 = vunpack.c.h.b16 %v620
  %v1141 = vunpack.c.l.b16 %v621
  %v1142 = vunpack.c.l.b16 %v622
  %v1143 = vunpack.c.h.b16 %v622
  %v1144 = vunpack.c.l.b16 %v623
  %v1145 = vunpack.c.l.b16 %v624
  %v1146 = vunpack.c.h.b16 %v624
  %v1147 = vunpack.c.l.b16 %v625
  %v1148 = vunpack.c.l.b16 %v626
  %v1149 = vunpack.c.h.b16 %v626
  %v1150 = vunpack.c.l.b16 %v627
  %v1151 = vunpack.c.l.b16 %v628
  %v1152 = vunpack.c.h.b16 %v628
  %v1153 = vunpack.c.l.b16 %v629
  %v1154 = vunpack.c.l.b16 %v630
  %v1155 = vunpack.c.h.b16 %v630
  %v1156 = vunpack.c.l.b16 %v631
  %v1157 = vunpack.c.l.b16 %v632
  %v1158 = vunpack.c.h.b16 %v632
  %v1159 = vunpack.c.l.b16 %v633
  %v1160 = vunpack.c.l.b16 %v634
  %v1161 = vunpack.c.h.b16 %v634
  %v1162 = vunpack.c.l.b16 %v635
  %v1163 = vunpack.c.l.b16 %v636
  %v1164 = vunpack.c.h.b16 %v636
  %v1165 = vunpack.c.l.b16 %v637
  %v1166 = vunpack.c.l.b16 %v638
  %v1167 = vunpack.c.h.b16 %v638
  %v1168 = vunpack.c.l.b16 %v639
  %v1169 = vunpack.c.l.b16 %v640
  %v1170 = vunpack.c.h.b16 %v640
  %v1171 = vunpack.c.l.b16 %v641
  %v1172 = vunpack.c.l.b16 %v642
  %v1173 = vunpack.c.h.b16 %v642
  %v1174 = vunpack.c.l.b16 %v643
  %v1175 = vunpack.c.l.b16 %v644
  %v1176 = vunpack.c.h.b16 %v644
  %v1177 = vunpack.c.l.b16 %v645
  %v1178 = vunpack.c.l.b16 %v646
  %v1179 = vunpack.c.h.b16 %v646
  %v1180 = vunpack.c.l.b16 %v647
  %v1181 = vunpack.c.l.b16 %v648
  %v1182 = vunpack.c.h.b16 %v648
  %v1183 = vunpack.c.l.b16 %v649
  %v1184 = vunpack.c.l.b16 %v650
  %v1185 = vunpack.c.h.b16 %v650
  %v1186 = vunpack.c.l.b16 %v651
  %v1187 = vunpack.c.l.b16 %v652
  %v1188 = vunpack.c.h.b16 %v652
  %v1189 = vunpack.c.l.b16 %v653
  %v1190 = vunpack.c.l.b16 %v654
  %v1191 = vunpack.c.h.b16 %v654
  %v1192 = vunpack.c.l.b16 %v655
  %v1193 = vunpack.c.l.b16 %v656
  %v1194 = vunpack.c.h.b16 %v656
  %v1195 = vunpack.c.l.b16 %v657
  %v1196 = vunpack.c.l.b16 %v658
  %v1197 = vunpack.c.h.b16 %v658
  %v1198 = vunpack.c.l.b16 %v659
  %v1199 = vunpack.c.l.b16 %v660
  %v1200 = vunpack.c.h.b16 %v660
  %v1201 = vunpack.c.l.b16 %v661
  %v1202 = vunpack.c.l.b16 %v662
  %v1203 = vunpack.c.h.b16 %v662
  %v1204 = vunpack.c.l.b16 %v663
  %v1205 = vunpack.c.l.b16 %v664
  %v1206 = vunpack.c.h.b16 %v664
  %v1207 = vunpack.c.l.b16 %v665
  %v1208 = vunpack.c.l.b16 %v666
  %v1209 = vunpack.c.h.b16 %v666
  %v1210 = vunpack.c.l.b16 %v667
  %v1211 = vunpack.c.l.b16 %v668
  %v1212 = vunpack.c.h.b16 %v668
  %v1213 = vunpack.c.l.b16 %v669
  %v1214 = vunpack.c.l.b16 %v670
  %v1215 = vunpack.c.h.b16 %v670
  %v1216 = vunpack.c.l.b16 %v671
  %v1217 = vunpack.c.l.b16 %v672
  %v1218 = vunpack.c.h.b16 %v672
  %v1219 = vunpack.c.l.b16 %v673
  %v1220 = vunpack.c.l.b16 %v674
  %v1221 = vunpack.c.h.b16 %v674
  %v1222 = vunpack.c.l.b16 %v675
  %v1223 = vunpack.c.l.b16 %v676
  %v1224 = vunpack.c.h.b16 %v676
  %v1225 = vunpack.c.l.b16 %v677
  %v1226 = vunpack.c.l.b16 %v678
  %v1227 = vunpack.c.h.b16 %v678
  %v1228 = vunpack.c.l.b16 %v679
  %v1229 = vunpack.c.l.b16 %v680
  %v1230 = vunpack.c.h.b16 %v680
  %v1231 = vunpack.c.l.b16 %v681
  %v1232 = vunpack.c.l.b16 %v682
  %v1233 = vunpack.c.h.b16 %v682
  %v1234 = vunpack.c.l.b16 %v683
  %v1235 = vunpack.c.l.b16 %v684
  %v1236 = vunpack.c.h.b16 %v684
  %v1237 = vunpack.c.l.b16 %v685
  %v1238 = vunpack.c.l.b16 %v686
  %v1239 = vunpack.c.h.b16 %v686
  %v1240 = vunpack.c.l.b16 %v687
  %v1241 = vunpack.c.l.b16 %v688
  %v1242 = vunpack.c.h.b16 %v688
  %v1243 = vunpack.c.l.b16 %v689
  %v1244 = vunpack.c.l.b16 %v690
  %v1245 = vunpack.c.h.b16 %v690
  %v1246 = vunpack.c.l.b16 %v691
  %v1247 = vunpack.c.l.b16 %v692
  %v1248 = vunpack.c.h.b16 %v692
  %v1249 = vunpack.c.l.b16 %v693
  %v1250 = vunpack.c.l.b16 %v694
  %v1251 = vunpack.c.h.b16 %v694
  %v1252 = vunpack.c.l.b16 %v695
  %v1253 = vunpack.c.l.b16 %v696
  %v1254 = vunpack.c.h.b16 %v696
  %v1255 = vunpack.c.l.b16 %v697
  %v1256 = vunpack.c.l.b16 %v698
  %v1257 = vunpack.c.h.b16 %v698
  %v1258 = vunpack.c.l.b16 %v699
  %v1259 = vunpack.c.l.b16 %v700
  %v1260 = vunpack.c.h.b16 %v700
  %v1261 = vunpack.c.l.b16 %v701
  %v1262 = vunpack.c.l.b16 %v702
  %v1263 = vunpack.c.h.b16 %v702
  %v1264 = vunpack.c.l.b16 %v703
  %v1265 = vunpack.c.l.b16 %v704
  %v1266 = vunpack.c.h.b16 %v704
  %v1267 = vunpack.c.l.b16 %v705
  %v1268 = vunpack.c.l.b16 %v706
  %v1269 = vunpack.c.h.b16 %v706
  %v1270 = vunpack.c.l.b16 %v707
  %v1271 = vunpack.c.l.b16 %v708
  %v1272 = vunpack.c.h.b16 %v708
  %v1273 = vunpack.c.l.b16 %v709
  %v1274 = vunpack.c.l.b16 %v710
  %v1275 = vunpack.c.h.b16 %v710
  %v1276 = vunpack.c.l.b16 %v711
  %v1277 = vunpack.c.l.b16 %v712
  %v1278 = vunpack.c.h.b16 %v712
  %v1279 = vunpack.c.l.b16 %v713
  %v1280 = vunpack.c.l.b16 %v714
  %v1281 = vunpack.c.h.b16 %v714
  %v1282 = vunpack.c.l.b16 %v715
  %v1283 = vunpack.c.l.b16 %v716
  %v1284 = vunpack.c.h.b16 %v716
  %v1285 = vunpack.c.l.b16 %v717
  %v1286 = vpack.c.b16 %v953, %v950
  %v1287 = vpack.c.b16 %v954, %v951
  %v1288 = vpack.c.b16 %v955, %v952
  %v1289 = vpack.c.b16 %v959, %v956
  %v1290 = vpack.c.b16 %v960, %v957
  %v1291 = vpack.c.b16 %v961, %v958
  %v1292 = vpack.c.b16 %v965, %v962
  %v1293 = vpack.c.b16 %v966, %v963
  %v1294 = vpack.c.b16 %v967, %v964
  %v1295 = vpack.c.b16 %v971, %v968
  %v1296 = vpack.c.b16 %v972, %v969
  %v1297 = vpack.c.b16 %v973, %v970
  %v1298 = vpack.c.b16 %v977, %v974
  %v1299 = vpack.c.b16 %v978, %v975
  %v1300 = vpack.c.b16 %v979, %v976
  %v1301 = vpack.c.b16 %v983, %v980
  %v1302 = vpack.c.b16 %v984, %v981
  %v1303 = vpack.c.b16 %v985, %v982
  %v1304 = vpack.c.b16 %v989, %v986
  %v1305 = vpack.c.b16 %v990, %v987
  %v1306 = vpack.c.b16 %v991, %v988
  %v1307 = vpack.c.b16 %v995, %v992
  %v1308 = vpack.c.b16 %v996, %v993
  %v1309 = vpack.c.b16 %v997, %v994
  %v1310 = vpack.c.b16 %v1001, %v998
  %v1311 = vpack.c.b16 %v1002, %v999
  %v1312 = vpack.c.b16 %v1003, %v1000
  %v1313 = vpack.c.b16 %v1007, %v1004
  %v1314 = vpack.c.b16 %v1008, %v1005
  %v1315 = vpack.c.b16 %v1009, %v1006
  %v1316 = vpack.c.b16 %v1013, %v1010
  %v1317 = vpack.c.b16 %v1014, %v1011
  %v1318 = vpack.c.b16 %v1015, %v1012
  %v1319 = vpack.c.b16 %v1019, %v1016
  %v1320 = vpack.c.b16 %v1020, %v1017
  %v1321 = vpack.c.b16 %v1021, %v1018
  %v1322 = vpack.c.b16 %v1025, %v1022
  %v1323 = vpack.c.b16 %v1026, %v1023
  %v1324 = vpack.c.b16 %v1027, %v1024
  %v1325 = vpack.c.b16 %v1031, %v1028
  %v1326 = vpack.c.b16 %v1032, %v1029
  %v1327 = vpack.c.b16 %v1033, %v1030
  %v1328 = vpack.c.b16 %v1037, %v1034
  %v1329 = vpack.c.b16 %v1038, %v1035
  %v1330 = vpack.c.b16 %v1039, %v1036
  %v1331 = vpack.c.b16 %v1043, %v1040
  %v1332 = vpack.c.b16 %v1044, %v1041
  %v1333 = vpack.c.b16 %v1045, %v1042
  %v1334 = vpack.c.b16 %v1049, %v1046
  %v1335 = vpack.c.b16 %v1050, %v1047
  %v1336 = vpack.c.b16 %v1051, %v1048
  %v1337 = vpack.c.b16 %v1055, %v1052
  %v1338 = vpack.c.b16 %v1056, %v1053
  %v1339 = vpack.c.b16 %v1057, %v1054
  %v1340 = vpack.c.b16 %v1061, %v1058
  %v1341 = vpack.c.b16 %v1062, %v1059
  %v1342 = vpack.c.b16 %v1063, %v1060
  %v1343 = vpack.c.b16 %v1067, %v1064
  %v1344 = vpack.c.b16 %v1068, %v1065
  %v1345 = vpack.c.b16 %v1069, %v1066
  %v1346 = vpack.c.b16 %v1073, %v1070
  %v1347 = vpack.c.b16 %v1074, %v1071
  %v1348 = vpack.c.b16 %v1075, %v1072
  %v1349 = vpack.c.b16 %v1079, %v1076
  %v1350 = vpack.c.b16 %v1080, %v1077
  %v1351 = vpack.c.b16 %v1081, %v1078
  %v1352 = vpack.c.b16 %v1085, %v1082
  %v1353 = vpack.c.b16 %v1086, %v1083
  %v1354 = vpack.c.b16 %v1087, %v1084
  %v1355 = vpack.c.b16 %v1091, %v1088
  %v1356 = vpack.c.b16 %v1092, %v1089
  %v1357 = vpack.c.b16 %v1093, %v1090
  %v1358 = vpack.c.b16 %v1097, %v1094
  %v1359 = vpack.c.b16 %v1098, %v1095
  %v1360 = vpack.c.b16 %v1099, %v1096
  %v1361 = vpack.c.b16 %v1103, %v1100
  %v1362 = vpack.c.b16 %v1104, %v1101
  %v1363 = vpack.c.b16 %v1105, %v1102
  %v1364 = vpack.c.b16 %v1109, %v1106
  %v1365 = vpack.c.b16 %v1110, %v1107
  %v1366 = vpack.c.b16 %v1111, %v1108
  %v1367 = vpack.c.b16 %v1115, %v1112
  %v1368 = vpack.c.b16 %v1116, %v1113
  %v1369 = vpack.c.b16 %v1117, %v1114
  %v1370 = vpack.c.b16 %v1121, %v1118
  %v1371 = vpack.c.b16 %v1122, %v1119
  %v1372 = vpack.c.b16 %v1123, %v1120
  %v1373 = vpack.c.b16 %v1127, %v1124
  %v1374 = vpack.c.b16 %v1128, %v1125
  %v1375 = vpack.c.b16 %v1129, %v1126
  %v1376 = vpack.c.b16 %v1133, %v1130
  %v1377 = vpack.c.b16 %v1134, %v1131
  %v1378 = vpack.c.b16 %v1135, %v1132
  %v1379 = vpack.c.b16 %v1139, %v1136
  %v1380 = vpack.c.b16 %v1140, %v1137
  %v1381 = vpack.c.b16 %v1141, %v1138
  %v1382 = vpack.c.b16 %v1145, %v1142
  %v1383 = vpack.c.b16 %v1146, %v1143
  %v1384 = vpack.c.b16 %v1147, %v1144
  %v1385 = vpack.c.b16 %v1151, %v1148
  %v1386 = vpack.c.b16 %v1152, %v1149
  %v1387 = vpack.c.b16 %v1153, %v1150
  %v1388 = vpack.c.b16 %v1157, %v1154
  %v1389 = vpack.c.b16 %v1158, %v1155
  %v1390 = vpack.c.b16 %v1159, %v1156
  %v1391 = vpack.c.b16 %v1163, %v1160
  %v1392 = vpack.c.b16 %v1164, %v1161
  %v1393 = vpack.c.b16 %v1165, %v1162
  %v1394 = vpack.c.b16 %v1169, %v1166
  %v1395 = vpack.c.b16 %v1170, %v1167
  %v1396 = vpack.c.b16 %v1171, %v1168
  %v1397 = vpack.c.b16 %v1175, %v1172
  %v1398 = vpack.c.b16 %v1176, %v1173
  %v1399 = vpack.c.b16 %v1177, %v1174
  %v1400 = vpack.c.b16 %v1181, %v1178
  %v1401 = vpack.c.b16 %v1182, %v1179
  %v1402 = vpack.c.b16 %v1183, %v1180
  %v1403 = vpack.c.b16 %v1187, %v1184
  %v1404 = vpack.c.b16 %v1188, %v1185
  %v1405 = vpack.c.b16 %v1189, %v1186
  %v1406 = vpack.c.b16 %v1193, %v1190
  %v1407 = vpack.c.b16 %v1194, %v1191
  %v1408 = vpack.c.b16 %v1195, %v1192
  %v1409 = vpack.c.b16 %v1199, %v1196
  %v1410 = vpack.c.b16 %v1200, %v1197
  %v1411 = vpack.c.b16 %v1201, %v1198
  %v1412 = vpack.c.b16 %v1205, %v1202
  %v1413 = vpack.c.b16 %v1206, %v1203
  %v1414 = vpack.c.b16 %v1207, %v1204
  %v1415 = vpack.c.b16 %v1211, %v1208
  %v1416 = vpack.c.b16 %v1212, %v1209
  %v1417 = vpack.c.b16 %v1213, %v1210
  %v1418 = vpack.c.b16 %v1217, %v1214
  %v1419 = vpack.c.b16 %v1218, %v1215
  %v1420 = vpack.c.b16 %v1219, %v1216
  %v1421 = vpack.c.b16 %v1223, %v1220
  %v1422 = vpack.c.b16 %v1224, %v1221
  %v1423 = vpack.c.b16 %v1225, %v1222
  %v1424 = vpack.c.b16 %v1229, %v1226
  %v1425 = vpack.c.b16 %v1230, %v1227
  %v1426 = vpack.c.b16 %v1231, %v1228
  %v1427 = vpack.c.b16 %v1235, %v1232
  %v1428 = vpack.c.b16 %v1236, %v1233
  %v1429 = vpack.c.b16 %v1237, %v1234
  %v1430 = vpack.c.b16 %v1241, %v1238
  %v1431 = vpack.c.b16 %v1242, %v1239
  %v1432 = vpack.c.b16 %v1243, %v1240
  %v1433 = vpack.c.b16 %v1247, %v1244
  %v1434 = vpack.c.b16 %v1248, %v1245
  %v1435 = vpack.c.b16 %v1249, %v1246
  %v1436 = vpack.c.b16 %v1253, %v1250
  %v1437 = vpack.c.b16 %v1254, %v1251
  %v1438 = vpack.c.b16 %v1255, %v1252
  %v1439 = vpack.c.b16 %v1259, %v1256
  %v1440 = vpack.c.b16 %v1260, %v1257
  %v1441 = vpack.c.b16 %v1261, %v1258
  %v1442 = vpack.c.b16 %v1265, %v1262
  %v1443 = vpack.c.b16 %v1266, %v1263
  %v1444 = vpack.c.b16 %v1267, %v1264
  %v1445 = vpack.c.b16 %v1271, %v1268
  %v1446 = vpack.c.b16 %v1272, %v1269
  %v1447 = vpack.c.b16 %v1273, %v1270
  %v1448 = vpack.c.b16 %v1277, %v1274
  %v1449 = vpack.c.b16 %v1278, %v1275
  %v1450 = vpack.c.b16 %v1279, %v1276
  %v1451 = vpack.c.b16 %v1283, %v1280
  %v1452 = vpack.c.b16 %v1284, %v1281
  %v1453 = vpack.c.b16 %v1285, %v1282
  %1622 = vmatpush.bf16.msra.mxu0 %v1307
  %1623 = vmatpush.bf16.msra.mxu0 %v1304
  %1624 = vmatpush.bf16.msra.mxu0 %v1301
  %1625 = vmatpush.bf16.msra.mxu0 %v1298
  %1626 = vmatpush.bf16.msra.mxu0 %v1295
  %1627 = vmatpush.bf16.msra.mxu0 %v1292
  %1628 = vmatpush.bf16.msra.mxu0 %v1289
  %1629 = vmatpush.bf16.msra.mxu0 %v1286
  %1630 = vmatmul.bf16.gmra.mxu0 %v487
  %v1631 = vpop.f32.mrf.mxu0
  %v1632 = vadd.f32 %v720, %v1631
  %v1633 = vpop.f32.mrf.mxu0
  %1634 = vdwg.mxu0
  %1635 = vmatpush.bf16.msra.mxu0 %v1331
  %1636 = vmatpush.bf16.msra.mxu0 %v1328
  %1637 = vmatpush.bf16.msra.mxu0 %v1325
  %1638 = vmatpush.bf16.msra.mxu0 %v1322
  %1639 = vmatpush.bf16.msra.mxu0 %v1319
  %1640 = vmatpush.bf16.msra.mxu0 %v1316
  %1641 = vmatpush.bf16.msra.mxu0 %v1313
  %1642 = vmatpush.bf16.msra.mxu0 %v1310
  %1643 = vmatmul.bf16.gmra.mxu0 %v488
  %v1644 = vpop.f32.mrf.mxu0
  %v1645 = vadd.f32 %v1632, %v1644
  %v1646 = vpop.f32.mrf.mxu0
  %1647 = vdwg.mxu0
  %1648 = vmatpush.bf16.msra.mxu0 %v1355
  %1649 = vmatpush.bf16.msra.mxu0 %v1352
  %1650 = vmatpush.bf16.msra.mxu0 %v1349
  %1651 = vmatpush.bf16.msra.mxu0 %v1346
  %1652 = vmatpush.bf16.msra.mxu0 %v1343
  %1653 = vmatpush.bf16.msra.mxu0 %v1340
  %1654 = vmatpush.bf16.msra.mxu0 %v1337
  %1655 = vmatpush.bf16.msra.mxu0 %v1334
  %1656 = vmatmul.bf16.gmra.mxu0 %v489
  %v1657 = vpop.f32.mrf.mxu0
  %v1658 = vadd.f32 %v1645, %v1657
  %v1659 = vpop.f32.mrf.mxu0
  %1660 = vdwg.mxu0
  %1661 = vmatpush.bf16.msra.mxu0 %v1379
  %1662 = vmatpush.bf16.msra.mxu0 %v1376
  %1663 = vmatpush.bf16.msra.mxu0 %v1373
  %1664 = vmatpush.bf16.msra.mxu0 %v1370
  %1665 = vmatpush.bf16.msra.mxu0 %v1367
  %1666 = vmatpush.bf16.msra.mxu0 %v1364
  %1667 = vmatpush.bf16.msra.mxu0 %v1361
  %1668 = vmatpush.bf16.msra.mxu0 %v1358
  %1669 = vmatmul.bf16.gmra.mxu0 %v490
  %v1670 = vpop.f32.mrf.mxu0
  %v1671 = vadd.f32 %v1658, %v1670
  %v1672 = vpop.f32.mrf.mxu0
  %1673 = vdwg.mxu0
  %1674 = vmatpush.bf16.msra.mxu0 %v1403
  %1675 = vmatpush.bf16.msra.mxu0 %v1400
  %1676 = vmatpush.bf16.msra.mxu0 %v1397
  %1677 = vmatpush.bf16.msra.mxu0 %v1394
  %1678 = vmatpush.bf16.msra.mxu0 %v1391
  %1679 = vmatpush.bf16.msra.mxu0 %v1388
  %1680 = vmatpush.bf16.msra.mxu0 %v1385
  %1681 = vmatpush.bf16.msra.mxu0 %v1382
  %1682 = vmatmul.bf16.gmra.mxu0 %v491
  %v1683 = vpop.f32.mrf.mxu0
  %v1684 = vadd.f32 %v1671, %v1683
  %v1685 = vpop.f32.mrf.mxu0
  %1686 = vdwg.mxu0
  %1687 = vmatpush.bf16.msra.mxu0 %v1427
  %1688 = vmatpush.bf16.msra.mxu0 %v1424
  %1689 = vmatpush.bf16.msra.mxu0 %v1421
  %1690 = vmatpush.bf16.msra.mxu0 %v1418
  %1691 = vmatpush.bf16.msra.mxu0 %v1415
  %1692 = vmatpush.bf16.msra.mxu0 %v1412
  %1693 = vmatpush.bf16.msra.mxu0 %v1409
  %1694 = vmatpush.bf16.msra.mxu0 %v1406
  %1695 = vmatmul.bf16.gmra.mxu0 %v492
  %v1696 = vpop.f32.mrf.mxu0
  %v1697 = vadd.f32 %v1684, %v1696
  %v1698 = vpop.f32.mrf.mxu0
  %1699 = vdwg.mxu0
  %1700 = vmatpush.bf16.msra.mxu0 %v1451
  %1701 = vmatpush.bf16.msra.mxu0 %v1448
  %1702 = vmatpush.bf16.msra.mxu0 %v1445
  %1703 = vmatpush.bf16.msra.mxu0 %v1442
  %1704 = vmatpush.bf16.msra.mxu0 %v1439
  %1705 = vmatpush.bf16.msra.mxu0 %v1436
  %1706 = vmatpush.bf16.msra.mxu0 %v1433
  %1707 = vmatpush.bf16.msra.mxu0 %v1430
  %1708 = vmatmul.bf16.gmra.mxu0 %v493
  %v1709 = vpop.f32.mrf.mxu0
  %v1710 = vadd.f32 %v1697, %v1709
  %v1711 = vpop.f32.mrf.mxu0
  %1712 = vdwg.mxu0
  %1713 = vmatpush.bf16.msra.mxu0 %v1308
  %1714 = vmatpush.bf16.msra.mxu0 %v1305
  %1715 = vmatpush.bf16.msra.mxu0 %v1302
  %1716 = vmatpush.bf16.msra.mxu0 %v1299
  %1717 = vmatpush.bf16.msra.mxu0 %v1296
  %1718 = vmatpush.bf16.msra.mxu0 %v1293
  %1719 = vmatpush.bf16.msra.mxu0 %v1290
  %1720 = vmatpush.bf16.msra.mxu0 %v1287
  %1721 = vmatmul.bf16.gmra.mxu0 %v487
  %v1722 = vpop.f32.mrf.mxu0
  %v1723 = vadd.f32 %v721, %v1722
  %v1724 = vpop.f32.mrf.mxu0
  %1725 = vdwg.mxu0
  %1726 = vmatpush.bf16.msra.mxu0 %v1332
  %1727 = vmatpush.bf16.msra.mxu0 %v1329
  %1728 = vmatpush.bf16.msra.mxu0 %v1326
  %1729 = vmatpush.bf16.msra.mxu0 %v1323
  %1730 = vmatpush.bf16.msra.mxu0 %v1320
  %1731 = vmatpush.bf16.msra.mxu0 %v1317
  %1732 = vmatpush.bf16.msra.mxu0 %v1314
  %1733 = vmatpush.bf16.msra.mxu0 %v1311
  %1734 = vmatmul.bf16.gmra.mxu0 %v488
  %v1735 = vpop.f32.mrf.mxu0
  %v1736 = vadd.f32 %v1723, %v1735
  %v1737 = vpop.f32.mrf.mxu0
  %1738 = vdwg.mxu0
  %1739 = vmatpush.bf16.msra.mxu0 %v1356
  %1740 = vmatpush.bf16.msra.mxu0 %v1353
  %1741 = vmatpush.bf16.msra.mxu0 %v1350
  %1742 = vmatpush.bf16.msra.mxu0 %v1347
  %1743 = vmatpush.bf16.msra.mxu0 %v1344
  %1744 = vmatpush.bf16.msra.mxu0 %v1341
  %1745 = vmatpush.bf16.msra.mxu0 %v1338
  %1746 = vmatpush.bf16.msra.mxu0 %v1335
  %1747 = vmatmul.bf16.gmra.mxu0 %v489
  %v1748 = vpop.f32.mrf.mxu0
  %v1749 = vadd.f32 %v1736, %v1748
  %v1750 = vpop.f32.mrf.mxu0
  %1751 = vdwg.mxu0
  %1752 = vmatpush.bf16.msra.mxu0 %v1380
  %1753 = vmatpush.bf16.msra.mxu0 %v1377
  %1754 = vmatpush.bf16.msra.mxu0 %v1374
  %1755 = vmatpush.bf16.msra.mxu0 %v1371
  %1756 = vmatpush.bf16.msra.mxu0 %v1368
  %1757 = vmatpush.bf16.msra.mxu0 %v1365
  %1758 = vmatpush.bf16.msra.mxu0 %v1362
  %1759 = vmatpush.bf16.msra.mxu0 %v1359
  %1760 = vmatmul.bf16.gmra.mxu0 %v490
  %v1761 = vpop.f32.mrf.mxu0
  %v1762 = vadd.f32 %v1749, %v1761
  %v1763 = vpop.f32.mrf.mxu0
  %1764 = vdwg.mxu0
  %1765 = vmatpush.bf16.msra.mxu0 %v1404
  %1766 = vmatpush.bf16.msra.mxu0 %v1401
  %1767 = vmatpush.bf16.msra.mxu0 %v1398
  %1768 = vmatpush.bf16.msra.mxu0 %v1395
  %1769 = vmatpush.bf16.msra.mxu0 %v1392
  %1770 = vmatpush.bf16.msra.mxu0 %v1389
  %1771 = vmatpush.bf16.msra.mxu0 %v1386
  %1772 = vmatpush.bf16.msra.mxu0 %v1383
  %1773 = vmatmul.bf16.gmra.mxu0 %v491
  %v1774 = vpop.f32.mrf.mxu0
  %v1775 = vadd.f32 %v1762, %v1774
  %v1776 = vpop.f32.mrf.mxu0
  %1777 = vdwg.mxu0
  %1778 = vmatpush.bf16.msra.mxu0 %v1428
  %1779 = vmatpush.bf16.msra.mxu0 %v1425
  %1780 = vmatpush.bf16.msra.mxu0 %v1422
  %1781 = vmatpush.bf16.msra.mxu0 %v1419
  %1782 = vmatpush.bf16.msra.mxu0 %v1416
  %1783 = vmatpush.bf16.msra.mxu0 %v1413
  %1784 = vmatpush.bf16.msra.mxu0 %v1410
  %1785 = vmatpush.bf16.msra.mxu0 %v1407
  %1786 = vmatmul.bf16.gmra.mxu0 %v492
  %v1787 = vpop.f32.mrf.mxu0
  %v1788 = vadd.f32 %v1775, %v1787
  %v1789 = vpop.f32.mrf.mxu0
  %1790 = vdwg.mxu0
  %1791 = vmatpush.bf16.msra.mxu0 %v1452
  %1792 = vmatpush.bf16.msra.mxu0 %v1449
  %1793 = vmatpush.bf16.msra.mxu0 %v1446
  %1794 = vmatpush.bf16.msra.mxu0 %v1443
  %1795 = vmatpush.bf16.msra.mxu0 %v1440
  %1796 = vmatpush.bf16.msra.mxu0 %v1437
  %1797 = vmatpush.bf16.msra.mxu0 %v1434
  %1798 = vmatpush.bf16.msra.mxu0 %v1431
  %1799 = vmatmul.bf16.gmra.mxu0 %v493
  %v1800 = vpop.f32.mrf.mxu0
  %v1801 = vadd.f32 %v1788, %v1800
  %v1802 = vpop.f32.mrf.mxu0
  %1803 = vdwg.mxu0
  %1804 = vmatpush.bf16.msra.mxu0 %v1309
  %1805 = vmatpush.bf16.msra.mxu0 %v1306
  %1806 = vmatpush.bf16.msra.mxu0 %v1303
  %1807 = vmatpush.bf16.msra.mxu0 %v1300
  %1808 = vmatpush.bf16.msra.mxu0 %v1297
  %1809 = vmatpush.bf16.msra.mxu0 %v1294
  %1810 = vmatpush.bf16.msra.mxu0 %v1291
  %1811 = vmatpush.bf16.msra.mxu0 %v1288
  %1812 = vmatmul.bf16.gmra.mxu0 %v487
  %v1813 = vpop.f32.mrf.mxu0
  %v1814 = vadd.f32 %v722, %v1813
  %v1815 = vpop.f32.mrf.mxu0
  %1816 = vdwg.mxu0
  %1817 = vmatpush.bf16.msra.mxu0 %v1333
  %1818 = vmatpush.bf16.msra.mxu0 %v1330
  %1819 = vmatpush.bf16.msra.mxu0 %v1327
  %1820 = vmatpush.bf16.msra.mxu0 %v1324
  %1821 = vmatpush.bf16.msra.mxu0 %v1321
  %1822 = vmatpush.bf16.msra.mxu0 %v1318
  %1823 = vmatpush.bf16.msra.mxu0 %v1315
  %1824 = vmatpush.bf16.msra.mxu0 %v1312
  %1825 = vmatmul.bf16.gmra.mxu0 %v488
  %v1826 = vpop.f32.mrf.mxu0
  %v1827 = vadd.f32 %v1814, %v1826
  %v1828 = vpop.f32.mrf.mxu0
  %1829 = vdwg.mxu0
  %1830 = vmatpush.bf16.msra.mxu0 %v1357
  %1831 = vmatpush.bf16.msra.mxu0 %v1354
  %1832 = vmatpush.bf16.msra.mxu0 %v1351
  %1833 = vmatpush.bf16.msra.mxu0 %v1348
  %1834 = vmatpush.bf16.msra.mxu0 %v1345
  %1835 = vmatpush.bf16.msra.mxu0 %v1342
  %1836 = vmatpush.bf16.msra.mxu0 %v1339
  %1837 = vmatpush.bf16.msra.mxu0 %v1336
  %1838 = vmatmul.bf16.gmra.mxu0 %v489
  %v1839 = vpop.f32.mrf.mxu0
  %v1840 = vadd.f32 %v1827, %v1839
  %v1841 = vpop.f32.mrf.mxu0
  %1842 = vdwg.mxu0
  %1843 = vmatpush.bf16.msra.mxu0 %v1381
  %1844 = vmatpush.bf16.msra.mxu0 %v1378
  %1845 = vmatpush.bf16.msra.mxu0 %v1375
  %1846 = vmatpush.bf16.msra.mxu0 %v1372
  %1847 = vmatpush.bf16.msra.mxu0 %v1369
  %1848 = vmatpush.bf16.msra.mxu0 %v1366
  %1849 = vmatpush.bf16.msra.mxu0 %v1363
  %1850 = vmatpush.bf16.msra.mxu0 %v1360
  %1851 = vmatmul.bf16.gmra.mxu0 %v490
  %v1852 = vpop.f32.mrf.mxu0
  %v1853 = vadd.f32 %v1840, %v1852
  %v1854 = vpop.f32.mrf.mxu0
  %1855 = vdwg.mxu0
  %1856 = vmatpush.bf16.msra.mxu0 %v1405
  %1857 = vmatpush.bf16.msra.mxu0 %v1402
  %1858 = vmatpush.bf16.msra.mxu0 %v1399
  %1859 = vmatpush.bf16.msra.mxu0 %v1396
  %1860 = vmatpush.bf16.msra.mxu0 %v1393
  %1861 = vmatpush.bf16.msra.mxu0 %v1390
  %1862 = vmatpush.bf16.msra.mxu0 %v1387
  %1863 = vmatpush.bf16.msra.mxu0 %v1384
  %1864 = vmatmul.bf16.gmra.mxu0 %v491
  %v1865 = vpop.f32.mrf.mxu0
  %v1866 = vadd.f32 %v1853, %v1865
  %v1867 = vpop.f32.mrf.mxu0
  %1868 = vdwg.mxu0
  %1869 = vmatpush.bf16.msra.mxu0 %v1429
  %1870 = vmatpush.bf16.msra.mxu0 %v1426
  %1871 = vmatpush.bf16.msra.mxu0 %v1423
  %1872 = vmatpush.bf16.msra.mxu0 %v1420
  %1873 = vmatpush.bf16.msra.mxu0 %v1417
  %1874 = vmatpush.bf16.msra.mxu0 %v1414
  %1875 = vmatpush.bf16.msra.mxu0 %v1411
  %1876 = vmatpush.bf16.msra.mxu0 %v1408
  %1877 = vmatmul.bf16.gmra.mxu0 %v492
  %v1878 = vpop.f32.mrf.mxu0
  %v1879 = vadd.f32 %v1866, %v1878
  %v1880 = vpop.f32.mrf.mxu0
  %1881 = vdwg.mxu0
  %1882 = vmatpush.bf16.msra.mxu0 %v1453
  %1883 = vmatpush.bf16.msra.mxu0 %v1450
  %1884 = vmatpush.bf16.msra.mxu0 %v1447
  %1885 = vmatpush.bf16.msra.mxu0 %v1444
  %1886 = vmatpush.bf16.msra.mxu0 %v1441
  %1887 = vmatpush.bf16.msra.mxu0 %v1438
  %1888 = vmatpush.bf16.msra.mxu0 %v1435
  %1889 = vmatpush.bf16.msra.mxu0 %v1432
  %1890 = vmatmul.bf16.gmra.mxu0 %v493
  %v1891 = vpop.f32.mrf.mxu0
  %v1892 = vadd.f32 %v1879, %v1891
  %v1893 = vpop.f32.mrf.mxu0
  %1894 = vdwg.mxu0
  %1895 = vst [vmem:[%s5] sm:$0xff] %v1710
  %1896 = vst [vmem:[%s5 + $0x8] sm:$0xff] %v1801
  %vm1897 = vcmask 261120
  %1898 = vst.msk [vmem:[%s5 + $0x10] sm:$0xff] %vm1897, %v1892
  // Predicated region
  $region22: #{representation_batched.1} parent=0 // pred_check
    _
  $region23: #{representation_batched.1} parent=0 // pred_check_branch
    %1900 = sbr.rel (0) target = $region25
  $region24: #{representation_batched.1} parent=0 // pred_region
    _
  $region25: #{representation_batched.1} parent=0 // pred_fallthru
    _
  // Predicated region
  $region26: #{representation_batched.1} parent=0 // pred_check
    _
  $region27: #{representation_batched.1} parent=0 // pred_check_branch
    %1902 = sbr.rel (0) target = $region29
  $region28: #{representation_batched.1} parent=0 // pred_region
    _
  $region29: #{representation_batched.1} parent=0 // pred_fallthru
    _

</llo_original>
